<compile_context>
chip_gen: v7x
topology: tpu7x:2x2x1
jax: 0.10.0
libtpu: 0.0.40
codegen_flags: <defaults>
</compile_context>

<pallas_src>
import functools

import jax
import jax.numpy as jnp
from jax import lax
from jax.experimental import pallas as pl
from jax.experimental.pallas import tpu as pltpu


def _elu(x, exp_dtype=jnp.float32):
    # ELU(alpha=1) with a single EUP exp: e = exp(min(x, 0)); where(x>0, x, e-1).
    # exp may run in bf16 (v6e/v7x EUP) while the select/sub stay in f32.
    e = jnp.exp(jnp.minimum(x, 0.0).astype(exp_dtype)).astype(jnp.float32)
    return jnp.where(x > 0, x, e - 1.0)


def _decoder_kernel(n_layers, elu_exp_dtype,
                    pos_ref, b0_ref, w0p_ref,
                    wb1_ref, bb1_ref, wb2_ref, bb2_ref,
                    w1a_ref, w1b_ref,
                    out_ref):
    """One (batch, point-tile) step in the transposed (features x points) layout.

    pos_ref : (1, 3, T)          points, lane-dense along T
    b0_ref  : (1, H, 1)          per-batch latent bias  w0z @ z  (f32)
    w0p_ref : (H, 3)             lin0.weight[:, :3]
    wb1_ref : (n_layers, H, H)   LinearBlock.lin1.weight (stacked)
    bb1_ref : (n_layers, H, 1)   LinearBlock.lin1.bias
    wb2_ref : (n_layers, H, H)   LinearBlock.lin2.weight
    bb2_ref : (n_layers, H, 1)   LinearBlock.lin2.bias
    w1a_ref : (3, H)             lin1a.weight
    w1b_ref : (3, 3)             lin1b.weight (zero-initialized in the module)
    out_ref : (1, 3, T)          c_pos = pos + res
    """
    f32 = jnp.float32
    wdt = wb1_ref.dtype                      # weight/matmul-operand dtype

    p = pos_ref[0].astype(f32)               # (3, T)

    # lin0: latent part is the precomputed per-batch bias; the K=3 positional
    # contraction runs as 3 VPU broadcast MACs (no MXU pass wasted on K=3).
    w0p = w0p_ref[...].astype(f32)            # (H, 3)
    h = (b0_ref[0].astype(f32)                # (H, 1) -> lane-broadcast
         + w0p[:, 0:1] * p[0:1, :]
         + w0p[:, 1:2] * p[1:2, :]
         + w0p[:, 2:3] * p[2:3, :])           # (H, T), f32

    def block(w1, b1, w2, b2, hh):
        r = _elu(jnp.dot(w1, hh.astype(wdt), preferred_element_type=f32)
                 + b1.astype(f32), elu_exp_dtype)
        r = _elu(jnp.dot(w2, r.astype(wdt), preferred_element_type=f32)
                 + b2.astype(f32), elu_exp_dtype)
        return hh + r

    if n_layers <= 3:
        # Small depth: static unroll (LLO scheduler sees everything).
        for l in range(n_layers):
            h = block(wb1_ref[l], bb1_ref[l], wb2_ref[l], bb2_ref[l], h)
    else:
        # Deep stacks: bound live ranges / code size with a real loop and
        # dynamic first-axis indexing of the stacked weights.
        h = lax.fori_loop(
            0, n_layers,
            lambda l, hh: block(wb1_ref[l], bb1_ref[l], wb2_ref[l], bb2_ref[l], hh),
            h)

    # lin1a (K=H contraction) stays on the MXU.
    r = _elu(jnp.dot(w1a_ref[...], h.astype(wdt), preferred_element_type=f32),
             elu_exp_dtype)                    # (3, T)

    # lin1b (3x3) as 3 VPU broadcast MACs instead of an MXU pass.
    w1b = w1b_ref[...].astype(f32)             # (3, 3)
    res = (w1b[:, 0:1] * r[0:1, :]
           + w1b[:, 1:2] * r[1:2, :]
           + w1b[:, 2:3] * r[2:3, :])          # (3, T)

    out_ref[0] = (p + res).astype(out_ref.dtype)


def _round_up(x, m):
    return -(-x // m) * m


def _vmem_capacity_bytes():
    """Per-core VMEM capacity; conservative 64 MiB fallback (v7x-sized)."""
    try:
        info = pltpu.get_tpu_info()
        cap = int(getattr(info, "vmem_capacity_bytes", 0) or 0)
        if cap > 0:
            return cap
    except Exception:
        pass
    return 64 * 1024 * 1024


def inverse_displacement_decoder(z, pos, params, *, n_layers,
                                 max_tile_cols=None,
                                 transposed_io=False,
                                 fast_elu_exp=None):
    """Pallas wrapper.

    z: (B, latent).  pos: (B, N, 3) -> returns (B, N, 3); with
    transposed_io=True pos is (B, 3, N) and the result is (B, 3, N), skipping
    the wrapper-side HBM transposes entirely.
    fast_elu_exp: run the ELU exp in bf16 (EUP bf16 path on v6e/v7x); defaults
    to True iff the weights are bf16.  Set False explicitly on v5e.
    """
    f32 = jnp.float32
    wdt = params["wb1"].dtype
    if transposed_io:
        B, _, N = pos.shape
    else:
        B, N, _ = pos.shape
    H = params["w0p"].shape[0]
    dsize = pos.dtype.itemsize

    if fast_elu_exp is None:
        fast_elu_exp = (wdt == jnp.bfloat16)
    elu_exp_dtype = jnp.bfloat16 if fast_elu_exp else jnp.float32

    # lin0 latent contribution: once per batch element in the wrapper
    # (B*H*L flops), passed to the kernel as a (1, H, 1) bias block.
    b0 = jnp.einsum("bl,hl->bh", z.astype(wdt), params["w0z"],
                    preferred_element_type=f32).astype(f32)[..., None]   # (B,H,1)

    # ---------- generation-aware tiling / VMEM budgeting -------------------
    vmem_cap = _vmem_capacity_bytes()
    # <= 48 MiB on 64-MiB parts (v7x), <= 96 MiB on 128-MiB parts (v5e/v6e):
    vmem_budget = min((vmem_cap * 3) // 4, 96 * 1024 * 1024)
    wnames = ("w0p", "wb1", "bb1", "wb2", "bb2", "w1a", "w1b")
    wbytes = sum(int(params[k].size) * params[k].dtype.itemsize for k in wnames)

    if max_tile_cols is None:
        max_tile_cols = 2048 if vmem_cap <= 64 * 1024 * 1024 else 8192

    # ~10 live (H, Tc) f32 temporaries + double-buffered pos/out blocks.
    live_per_col = 10 * H * 4 + 2 * 2 * 3 * max(dsize, 4)
    tc_cap = (int(vmem_budget * 0.6) - 2 * wbytes) // live_per_col
    tc_cap = max(128, (tc_cap // 128) * 128)

    n128 = _round_up(max(N, 1), 128)
    Tc = min(int(max_tile_cols), tc_cap, n128)
    Tc = max(128, (Tc // 128) * 128)
    # v7x megacore: guarantee >= 2 grid steps when B == 1 (else one TC idles).
    if B == 1 and -(-n128 // Tc) < 2 and Tc > 128:
        Tc = max(128, _round_up(Tc // 2, 128))
    steps = -(-n128 // Tc)
    N_pad = steps * Tc

    # ---------- layout / padding plumbing ----------------------------------
    pos_t = pos if transposed_io else jnp.transpose(pos, (0, 2, 1))   # (B, 3, N)
    if N_pad != N:
        pos_t = jnp.pad(pos_t, ((0, 0), (0, 0), (0, N_pad - N)))

    # Weights have constant index maps (fetched once); single-buffer them when
    # the stack is large so they don't cost 2x VMEM (matters on v7x's 64 MiB).
    wmode = dict(pipeline_mode=pl.Buffered(1)) if wbytes >= (2 << 20) else {}

    kernel = functools.partial(_decoder_kernel, n_layers, elu_exp_dtype)

    flops = int(2 * B * N_pad * (4 * H + n_layers * 2 * H * H + 3 * H + 9))
    transcendentals = int(B * N_pad * (2 * n_layers * H + 3))
    bytes_accessed = int(2 * B * N_pad * 3 * dsize + B * H * 4 + wbytes)

    io_bytes = 2 * 2 * 3 * Tc * dsize + 2 * H * 4
    need = 2 * wbytes + io_bytes + 10 * H * Tc * 4
    vmem_limit = int(min(vmem_budget, max(16 * 1024 * 1024, (need * 3) // 2)))

    grid = (B, steps)

    out_t = pl.pallas_call(
        kernel,
        out_shape=jax.ShapeDtypeStruct((B, 3, N_pad), pos.dtype),
        grid=grid,
        in_specs=[
            pl.BlockSpec((1, 3, Tc), lambda b, i: (b, 0, i)),                 # pos_t
            pl.BlockSpec((1, H, 1), lambda b, i: (b, 0, 0)),                  # b0
            pl.BlockSpec((H, 3), lambda b, i: (0, 0), **wmode),               # w0p
            pl.BlockSpec((n_layers, H, H), lambda b, i: (0, 0, 0), **wmode),  # wb1
            pl.BlockSpec((n_layers, H, 1), lambda b, i: (0, 0, 0), **wmode),  # bb1
            pl.BlockSpec((n_layers, H, H), lambda b, i: (0, 0, 0), **wmode),  # wb2
            pl.BlockSpec((n_layers, H, 1), lambda b, i: (0, 0, 0), **wmode),  # bb2
            pl.BlockSpec((3, H), lambda b, i: (0, 0), **wmode),               # w1a
            pl.BlockSpec((3, 3), lambda b, i: (0, 0), **wmode),               # w1b
        ],
        out_specs=pl.BlockSpec((1, 3, Tc), lambda b, i: (b, 0, i)),
        compiler_params=pltpu.CompilerParams(
            dimension_semantics=("parallel", "parallel"),
            vmem_limit_bytes=vmem_limit),
        cost_estimate=pl.CostEstimate(flops=flops,
                                      transcendentals=transcendentals,
                                      bytes_accessed=bytes_accessed),
    )(pos_t, b0, params["w0p"], params["wb1"], params["bb1"],
      params["wb2"], params["bb2"], params["w1a"], params["w1b"])

    if N_pad != N:
        out_t = out_t[:, :, :N]
    return out_t if transposed_io else jnp.transpose(out_t, (0, 2, 1))


def decoder_reference(z, pos, params, *, n_layers):
    """Pure-JAX reference mirroring the PyTorch forward (same dtype policy)."""
    f32 = jnp.float32
    wdt = params["w0p"].dtype
    B, N, _ = pos.shape
    L = z.shape[1]
    conf = jnp.broadcast_to(z[:, None, :], (B, N, L))
    x = jnp.concatenate([pos, conf], axis=2).astype(wdt)
    w0 = jnp.concatenate([params["w0p"], params["w0z"]], axis=1)   # (H, 3+L)
    h = jnp.einsum("bnf,hf->bnh", x, w0, preferred_element_type=f32)
    for l in range(n_layers):
        r = _elu(jnp.einsum("bnh,gh->bng", h.astype(wdt), params["wb1"][l],
                            preferred_element_type=f32)
                 + params["bb1"][l][:, 0].astype(f32))
        r = _elu(jnp.einsum("bnh,gh->bng", r.astype(wdt), params["wb2"][l],
                            preferred_element_type=f32)
                 + params["bb2"][l][:, 0].astype(f32))
        h = h + r
    r = _elu(jnp.einsum("bnh,gh->bng", h.astype(wdt), params["w1a"],
                        preferred_element_type=f32))
    r = jnp.einsum("bng,dg->bnd", r.astype(wdt), params["w1b"],
                   preferred_element_type=f32)
    return (pos.astype(f32) + r).astype(pos.dtype)


def init_params(key, latent_dim, n_neurons, n_layers, *,
                dtype=jnp.float32, zero_lin1b=True):
    """Deterministic synthetic parameters (PyTorch-style uniform fan-in init).

    Weights stay in the PyTorch (out_features, in_features) orientation because
    the kernel uses the transposed activation layout (h = W @ x_t).  lin0 is
    stored split into its pos / latent columns.  bf16 weights are the
    recommended configuration on v6e/v7x (MXU-native rate, half the HBM/VMEM);
    f32 stays the default for module-faithful numerics.
    """
    H, L = n_neurons, latent_dim
    keys = jax.random.split(key, 8)

    def u(k, shape, fan_in):
        bound = float(fan_in) ** -0.5
        return jax.random.uniform(k, shape, jnp.float32, -bound, bound).astype(dtype)

    fin0 = 3 + L
    params = {
        "w0p": u(keys[0], (H, 3), fin0),                 # lin0.weight[:, :3]
        "w0z": u(keys[1], (H, L), fin0),                 # lin0.weight[:, 3:]
        "wb1": u(keys[2], (n_layers, H, H), H),          # LinearBlock.lin1.weight
        "bb1": u(keys[3], (n_layers, H, 1), H),          # LinearBlock.lin1.bias
        "wb2": u(keys[4], (n_layers, H, H), H),          # LinearBlock.lin2.weight
        "bb2": u(keys[5], (n_layers, H, 1), H),          # LinearBlock.lin2.bias
        "w1a": u(keys[6], (3, H), H),                    # lin1a.weight (no bias)
        # lin1b.weight.data.fill_(0.0) in the module __init__:
        "w1b": (jnp.zeros((3, 3), dtype) if zero_lin1b
                else u(keys[7], (3, 3), 3)),
    }
    return params


if __name__ == "__main__":
    key = jax.random.PRNGKey(0)
    kz, kp, kw, kw2 = jax.random.split(key, 4)

    # 1) Module-faithful f32 params (lin1b zero-init -> c_pos == pos) with a
    #    non-128-multiple N to exercise the pad + slice path.
    B, N, L, H, NL = 2, 200, 8, 32, 2
    z = jax.random.normal(kz, (B, L), jnp.float32)
    pos = jax.random.uniform(kp, (B, N, 3), jnp.float32, -0.5, 0.5)

    params = init_params(kw, L, H, NL, zero_lin1b=True)
    out = jax.block_until_ready(
        inverse_displacement_decoder(z, pos, params, n_layers=NL))
    ref = decoder_reference(z, pos, params, n_layers=NL)
    assert out.shape == (B, N, 3) and out.dtype == pos.dtype
    assert jnp.allclose(out, ref, atol=1e-4, rtol=1e-4)
    assert jnp.allclose(out, pos, atol=1e-6)

    # 2) Non-zero lin1b (full compute path), f32; plus the transposed-IO path
    #    (caller supplies/consumes (B,3,N), no wrapper HBM transposes).
    params_nz = init_params(kw, L, H, NL, zero_lin1b=False)
    out_nz = jax.block_until_ready(
        inverse_displacement_decoder(z, pos, params_nz, n_layers=NL))
    ref_nz = decoder_reference(z, pos, params_nz, n_layers=NL)
    assert jnp.allclose(out_nz, ref_nz, atol=1e-4, rtol=1e-4)

    pos_t = jnp.transpose(pos, (0, 2, 1))
    out_t = jax.block_until_ready(
        inverse_displacement_decoder(z, pos_t, params_nz, n_layers=NL,
                                     transposed_io=True))
    assert out_t.shape == (B, 3, N)
    assert jnp.allclose(out_t, jnp.transpose(out_nz, (0, 2, 1)), atol=1e-6)

    # 3) bf16 weights (v6e/v7x config): bf16 MXU operands, f32 accumulation,
    #    bf16 EUP exp for the ELU.
    params_bf = init_params(kw, L, H, NL, dtype=jnp.bfloat16, zero_lin1b=False)
    out_bf = jax.block_until_ready(
        inverse_displacement_decoder(z, pos, params_bf, n_layers=NL))
    ref_bf = decoder_reference(z, pos, params_bf, n_layers=NL)
    assert jnp.allclose(out_bf, ref_bf, atol=3e-2, rtol=3e-2)

    # 4) Deeper stack (lax.fori_loop path) + B == 1 (megacore >=2-step tiling).
    B1, N1, NL1 = 1, 256, 4
    z1 = jax.random.normal(kz, (B1, L), jnp.float32)
    pos1 = jax.random.uniform(kp, (B1, N1, 3), jnp.float32, -0.5, 0.5)
    params4 = init_params(kw2, L, H, NL1, zero_lin1b=False)
    out4 = jax.block_until_ready(
        inverse_displacement_decoder(z1, pos1, params4, n_layers=NL1))
    ref4 = decoder_reference(z1, pos1, params4, n_layers=NL1)
    assert jnp.allclose(out4, ref4, atol=1e-4, rtol=1e-4)

    print("KERNEL_OK")
</pallas_src>

<mosaic_0001>
module attributes {stable_mosaic.version = 11 : i64} {
  func.func @_decoder_kernel(%arg0: i32, %arg1: i32, %arg2: memref<1x3x256xf32, #tpu.memory_space<vmem>>, %arg3: memref<1x32x1xf32, #tpu.memory_space<vmem>>, %arg4: memref<32x3xf32, #tpu.memory_space<vmem>>, %arg5: memref<2x32x32xf32, #tpu.memory_space<vmem>>, %arg6: memref<2x32x1xf32, #tpu.memory_space<vmem>>, %arg7: memref<2x32x32xf32, #tpu.memory_space<vmem>>, %arg8: memref<2x32x1xf32, #tpu.memory_space<vmem>>, %arg9: memref<3x32xf32, #tpu.memory_space<vmem>>, %arg10: memref<3x3xf32, #tpu.memory_space<vmem>>, %arg11: memref<1x3x256xf32, #tpu.memory_space<vmem>>) attributes {dimension_semantics = [#tpu.dimension_semantics<parallel>, #tpu.dimension_semantics<parallel>], iteration_bounds = array<i64: 2, 1>, scalar_prefetch = 0 : i64, scratch_operands = 0 : i64, tpu.core_type = #tpu.core_type<tc>, window_params = [{transform_indices = @transform_0, window_bounds = array<i64: 1, 3, 256>}, {transform_indices = @transform_1, window_bounds = array<i64: 1, 32, 1>}, {pipeline_mode = #tpu.pipeline_mode<synchronous>, transform_indices = @transform_2, window_bounds = array<i64: 32, 3>}, {pipeline_mode = #tpu.pipeline_mode<synchronous>, transform_indices = @transform_3, window_bounds = array<i64: 2, 32, 32>}, {pipeline_mode = #tpu.pipeline_mode<synchronous>, transform_indices = @transform_4, window_bounds = array<i64: 2, 32, 1>}, {pipeline_mode = #tpu.pipeline_mode<synchronous>, transform_indices = @transform_5, window_bounds = array<i64: 2, 32, 32>}, {pipeline_mode = #tpu.pipeline_mode<synchronous>, transform_indices = @transform_6, window_bounds = array<i64: 2, 32, 1>}, {pipeline_mode = #tpu.pipeline_mode<synchronous>, transform_indices = @transform_7, window_bounds = array<i64: 3, 32>}, {pipeline_mode = #tpu.pipeline_mode<synchronous>, transform_indices = @transform_8, window_bounds = array<i64: 3, 3>}, {transform_indices = @transform_9, window_bounds = array<i64: 1, 3, 256>}]} {
    %c0 = arith.constant 0 : index
    %c0_0 = arith.constant 0 : index
    %c0_1 = arith.constant 0 : index
    %0 = vector.load %arg2[%c0, %c0_0, %c0_1] : memref<1x3x256xf32, #tpu.memory_space<vmem>>, vector<1x3x256xf32>
    %1 = vector.shape_cast %0 : vector<1x3x256xf32> to vector<3x256xf32>
    %c0_2 = arith.constant 0 : index
    %c0_3 = arith.constant 0 : index
    %2 = vector.load %arg4[%c0_2, %c0_3] : memref<32x3xf32, #tpu.memory_space<vmem>>, vector<32x3xf32>
    %c0_4 = arith.constant 0 : index
    %c0_5 = arith.constant 0 : index
    %c0_6 = arith.constant 0 : index
    %3 = vector.load %arg3[%c0_4, %c0_5, %c0_6] : memref<1x32x1xf32, #tpu.memory_space<vmem>>, vector<1x32x1xf32>
    %4 = vector.shape_cast %3 : vector<1x32x1xf32> to vector<32x1xf32>
    %5 = vector.extract_strided_slice %2 {offsets = [0, 0], sizes = [32, 1], strides = [1, 1]} : vector<32x3xf32> to vector<32x1xf32>
    %6 = vector.extract_strided_slice %1 {offsets = [0, 0], sizes = [1, 256], strides = [1, 1]} : vector<3x256xf32> to vector<1x256xf32>
    %7 = vector.broadcast %5 : vector<32x1xf32> to vector<32x256xf32>
    %8 = vector.broadcast %6 : vector<1x256xf32> to vector<32x256xf32>
    %9 = arith.mulf %7, %8 : vector<32x256xf32>
    %10 = vector.broadcast %4 : vector<32x1xf32> to vector<32x256xf32>
    %11 = arith.addf %10, %9 : vector<32x256xf32>
    %12 = vector.extract_strided_slice %2 {offsets = [0, 1], sizes = [32, 1], strides = [1, 1]} : vector<32x3xf32> to vector<32x1xf32>
    %13 = vector.extract_strided_slice %1 {offsets = [1, 0], sizes = [1, 256], strides = [1, 1]} : vector<3x256xf32> to vector<1x256xf32>
    %14 = vector.broadcast %12 : vector<32x1xf32> to vector<32x256xf32>
    %15 = vector.broadcast %13 : vector<1x256xf32> to vector<32x256xf32>
    %16 = arith.mulf %14, %15 : vector<32x256xf32>
    %17 = arith.addf %11, %16 : vector<32x256xf32>
    %18 = vector.extract_strided_slice %2 {offsets = [0, 2], sizes = [32, 1], strides = [1, 1]} : vector<32x3xf32> to vector<32x1xf32>
    %19 = vector.extract_strided_slice %1 {offsets = [2, 0], sizes = [1, 256], strides = [1, 1]} : vector<3x256xf32> to vector<1x256xf32>
    %20 = vector.broadcast %18 : vector<32x1xf32> to vector<32x256xf32>
    %21 = vector.broadcast %19 : vector<1x256xf32> to vector<32x256xf32>
    %22 = arith.mulf %20, %21 : vector<32x256xf32>
    %23 = arith.addf %17, %22 : vector<32x256xf32>
    %c0_7 = arith.constant 0 : index
    %c0_8 = arith.constant 0 : index
    %c0_9 = arith.constant 0 : index
    %24 = vector.load %arg5[%c0_7, %c0_8, %c0_9] : memref<2x32x32xf32, #tpu.memory_space<vmem>>, vector<1x32x32xf32>
    %25 = vector.shape_cast %24 : vector<1x32x32xf32> to vector<32x32xf32>
    %c0_10 = arith.constant 0 : index
    %c0_11 = arith.constant 0 : index
    %c0_12 = arith.constant 0 : index
    %26 = vector.load %arg6[%c0_10, %c0_11, %c0_12] : memref<2x32x1xf32, #tpu.memory_space<vmem>>, vector<1x32x1xf32>
    %27 = vector.shape_cast %26 : vector<1x32x1xf32> to vector<32x1xf32>
    %c0_13 = arith.constant 0 : index
    %c0_14 = arith.constant 0 : index
    %c0_15 = arith.constant 0 : index
    %28 = vector.load %arg7[%c0_13, %c0_14, %c0_15] : memref<2x32x32xf32, #tpu.memory_space<vmem>>, vector<1x32x32xf32>
    %29 = vector.shape_cast %28 : vector<1x32x32xf32> to vector<32x32xf32>
    %c0_16 = arith.constant 0 : index
    %c0_17 = arith.constant 0 : index
    %c0_18 = arith.constant 0 : index
    %30 = vector.load %arg8[%c0_16, %c0_17, %c0_18] : memref<2x32x1xf32, #tpu.memory_space<vmem>>, vector<1x32x1xf32>
    %31 = vector.shape_cast %30 : vector<1x32x1xf32> to vector<32x1xf32>
    %cst = arith.constant dense<0.000000e+00> : vector<32x256xf32>
    %32 = tpu.matmul %25, %23, %cst {dimension_numbers = #tpu.dot_dimension_numbers<[1], [0], [0], [1], [0, 0, 1, 1], [], []>} : vector<32x32xf32>, vector<32x256xf32>, vector<32x256xf32> -> vector<32x256xf32>
    %33 = vector.broadcast %27 : vector<32x1xf32> to vector<32x256xf32>
    %34 = arith.addf %32, %33 : vector<32x256xf32>
    %cst_19 = arith.constant 0.000000e+00 : f32
    %35 = vector.broadcast %cst_19 : f32 to vector<32x256xf32>
    %36 = arith.minimumf %34, %35 : vector<32x256xf32>
    %37 = math.exp %36 : vector<32x256xf32>
    %cst_20 = arith.constant 0.000000e+00 : f32
    %38 = vector.broadcast %cst_20 : f32 to vector<32x256xf32>
    %39 = arith.cmpf ogt, %34, %38 : vector<32x256xf32>
    %cst_21 = arith.constant 1.000000e+00 : f32
    %40 = vector.broadcast %cst_21 : f32 to vector<32x256xf32>
    %41 = arith.subf %37, %40 : vector<32x256xf32>
    %42 = arith.select %39, %34, %41 : vector<32x256xi1>, vector<32x256xf32>
    %cst_22 = arith.constant dense<0.000000e+00> : vector<32x256xf32>
    %43 = tpu.matmul %29, %42, %cst_22 {dimension_numbers = #tpu.dot_dimension_numbers<[1], [0], [0], [1], [0, 0, 1, 1], [], []>} : vector<32x32xf32>, vector<32x256xf32>, vector<32x256xf32> -> vector<32x256xf32>
    %44 = vector.broadcast %31 : vector<32x1xf32> to vector<32x256xf32>
    %45 = arith.addf %43, %44 : vector<32x256xf32>
    %cst_23 = arith.constant 0.000000e+00 : f32
    %46 = vector.broadcast %cst_23 : f32 to vector<32x256xf32>
    %47 = arith.minimumf %45, %46 : vector<32x256xf32>
    %48 = math.exp %47 : vector<32x256xf32>
    %cst_24 = arith.constant 0.000000e+00 : f32
    %49 = vector.broadcast %cst_24 : f32 to vector<32x256xf32>
    %50 = arith.cmpf ogt, %45, %49 : vector<32x256xf32>
    %cst_25 = arith.constant 1.000000e+00 : f32
    %51 = vector.broadcast %cst_25 : f32 to vector<32x256xf32>
    %52 = arith.subf %48, %51 : vector<32x256xf32>
    %53 = arith.select %50, %45, %52 : vector<32x256xi1>, vector<32x256xf32>
    %54 = arith.addf %23, %53 : vector<32x256xf32>
    %c1 = arith.constant 1 : index
    %c0_26 = arith.constant 0 : index
    %c0_27 = arith.constant 0 : index
    %55 = vector.load %arg5[%c1, %c0_26, %c0_27] : memref<2x32x32xf32, #tpu.memory_space<vmem>>, vector<1x32x32xf32>
    %56 = vector.shape_cast %55 : vector<1x32x32xf32> to vector<32x32xf32>
    %c1_28 = arith.constant 1 : index
    %c0_29 = arith.constant 0 : index
    %c0_30 = arith.constant 0 : index
    %57 = vector.load %arg6[%c1_28, %c0_29, %c0_30] : memref<2x32x1xf32, #tpu.memory_space<vmem>>, vector<1x32x1xf32>
    %58 = vector.shape_cast %57 : vector<1x32x1xf32> to vector<32x1xf32>
    %c1_31 = arith.constant 1 : index
    %c0_32 = arith.constant 0 : index
    %c0_33 = arith.constant 0 : index
    %59 = vector.load %arg7[%c1_31, %c0_32, %c0_33] : memref<2x32x32xf32, #tpu.memory_space<vmem>>, vector<1x32x32xf32>
    %60 = vector.shape_cast %59 : vector<1x32x32xf32> to vector<32x32xf32>
    %c1_34 = arith.constant 1 : index
    %c0_35 = arith.constant 0 : index
    %c0_36 = arith.constant 0 : index
    %61 = vector.load %arg8[%c1_34, %c0_35, %c0_36] : memref<2x32x1xf32, #tpu.memory_space<vmem>>, vector<1x32x1xf32>
    %62 = vector.shape_cast %61 : vector<1x32x1xf32> to vector<32x1xf32>
    %cst_37 = arith.constant dense<0.000000e+00> : vector<32x256xf32>
    %63 = tpu.matmul %56, %54, %cst_37 {dimension_numbers = #tpu.dot_dimension_numbers<[1], [0], [0], [1], [0, 0, 1, 1], [], []>} : vector<32x32xf32>, vector<32x256xf32>, vector<32x256xf32> -> vector<32x256xf32>
    %64 = vector.broadcast %58 : vector<32x1xf32> to vector<32x256xf32>
    %65 = arith.addf %63, %64 : vector<32x256xf32>
    %cst_38 = arith.constant 0.000000e+00 : f32
    %66 = vector.broadcast %cst_38 : f32 to vector<32x256xf32>
    %67 = arith.minimumf %65, %66 : vector<32x256xf32>
    %68 = math.exp %67 : vector<32x256xf32>
    %cst_39 = arith.constant 0.000000e+00 : f32
    %69 = vector.broadcast %cst_39 : f32 to vector<32x256xf32>
    %70 = arith.cmpf ogt, %65, %69 : vector<32x256xf32>
    %cst_40 = arith.constant 1.000000e+00 : f32
    %71 = vector.broadcast %cst_40 : f32 to vector<32x256xf32>
    %72 = arith.subf %68, %71 : vector<32x256xf32>
    %73 = arith.select %70, %65, %72 : vector<32x256xi1>, vector<32x256xf32>
    %cst_41 = arith.constant dense<0.000000e+00> : vector<32x256xf32>
    %74 = tpu.matmul %60, %73, %cst_41 {dimension_numbers = #tpu.dot_dimension_numbers<[1], [0], [0], [1], [0, 0, 1, 1], [], []>} : vector<32x32xf32>, vector<32x256xf32>, vector<32x256xf32> -> vector<32x256xf32>
    %75 = vector.broadcast %62 : vector<32x1xf32> to vector<32x256xf32>
    %76 = arith.addf %74, %75 : vector<32x256xf32>
    %cst_42 = arith.constant 0.000000e+00 : f32
    %77 = vector.broadcast %cst_42 : f32 to vector<32x256xf32>
    %78 = arith.minimumf %76, %77 : vector<32x256xf32>
    %79 = math.exp %78 : vector<32x256xf32>
    %cst_43 = arith.constant 0.000000e+00 : f32
    %80 = vector.broadcast %cst_43 : f32 to vector<32x256xf32>
    %81 = arith.cmpf ogt, %76, %80 : vector<32x256xf32>
    %cst_44 = arith.constant 1.000000e+00 : f32
    %82 = vector.broadcast %cst_44 : f32 to vector<32x256xf32>
    %83 = arith.subf %79, %82 : vector<32x256xf32>
    %84 = arith.select %81, %76, %83 : vector<32x256xi1>, vector<32x256xf32>
    %85 = arith.addf %54, %84 : vector<32x256xf32>
    %c0_45 = arith.constant 0 : index
    %c0_46 = arith.constant 0 : index
    %86 = vector.load %arg9[%c0_45, %c0_46] : memref<3x32xf32, #tpu.memory_space<vmem>>, vector<3x32xf32>
    %cst_47 = arith.constant dense<0.000000e+00> : vector<3x256xf32>
    %87 = tpu.matmul %86, %85, %cst_47 {dimension_numbers = #tpu.dot_dimension_numbers<[1], [0], [0], [1], [0, 0, 1, 1], [], []>} : vector<3x32xf32>, vector<32x256xf32>, vector<3x256xf32> -> vector<3x256xf32>
    %cst_48 = arith.constant 0.000000e+00 : f32
    %88 = vector.broadcast %cst_48 : f32 to vector<3x256xf32>
    %89 = arith.minimumf %87, %88 : vector<3x256xf32>
    %90 = math.exp %89 : vector<3x256xf32>
    %cst_49 = arith.constant 0.000000e+00 : f32
    %91 = vector.broadcast %cst_49 : f32 to vector<3x256xf32>
    %92 = arith.cmpf ogt, %87, %91 : vector<3x256xf32>
    %cst_50 = arith.constant 1.000000e+00 : f32
    %93 = vector.broadcast %cst_50 : f32 to vector<3x256xf32>
    %94 = arith.subf %90, %93 : vector<3x256xf32>
    %95 = arith.select %92, %87, %94 : vector<3x256xi1>, vector<3x256xf32>
    %c0_51 = arith.constant 0 : index
    %c0_52 = arith.constant 0 : index
    %96 = vector.load %arg10[%c0_51, %c0_52] : memref<3x3xf32, #tpu.memory_space<vmem>>, vector<3x3xf32>
    %97 = vector.extract_strided_slice %96 {offsets = [0, 0], sizes = [3, 1], strides = [1, 1]} : vector<3x3xf32> to vector<3x1xf32>
    %98 = vector.extract_strided_slice %95 {offsets = [0, 0], sizes = [1, 256], strides = [1, 1]} : vector<3x256xf32> to vector<1x256xf32>
    %99 = vector.broadcast %97 : vector<3x1xf32> to vector<3x256xf32>
    %100 = vector.broadcast %98 : vector<1x256xf32> to vector<3x256xf32>
    %101 = arith.mulf %99, %100 : vector<3x256xf32>
    %102 = vector.extract_strided_slice %96 {offsets = [0, 1], sizes = [3, 1], strides = [1, 1]} : vector<3x3xf32> to vector<3x1xf32>
    %103 = vector.extract_strided_slice %95 {offsets = [1, 0], sizes = [1, 256], strides = [1, 1]} : vector<3x256xf32> to vector<1x256xf32>
    %104 = vector.broadcast %102 : vector<3x1xf32> to vector<3x256xf32>
    %105 = vector.broadcast %103 : vector<1x256xf32> to vector<3x256xf32>
    %106 = arith.mulf %104, %105 : vector<3x256xf32>
    %107 = arith.addf %101, %106 : vector<3x256xf32>
    %108 = vector.extract_strided_slice %96 {offsets = [0, 2], sizes = [3, 1], strides = [1, 1]} : vector<3x3xf32> to vector<3x1xf32>
    %109 = vector.extract_strided_slice %95 {offsets = [2, 0], sizes = [1, 256], strides = [1, 1]} : vector<3x256xf32> to vector<1x256xf32>
    %110 = vector.broadcast %108 : vector<3x1xf32> to vector<3x256xf32>
    %111 = vector.broadcast %109 : vector<1x256xf32> to vector<3x256xf32>
    %112 = arith.mulf %110, %111 : vector<3x256xf32>
    %113 = arith.addf %107, %112 : vector<3x256xf32>
    %114 = arith.addf %1, %113 : vector<3x256xf32>
    %c0_53 = arith.constant 0 : index
    %c0_54 = arith.constant 0 : index
    %c0_55 = arith.constant 0 : index
    %115 = vector.load %arg11[%c0_53, %c0_54, %c0_55] : memref<1x3x256xf32, #tpu.memory_space<vmem>>, vector<1x3x256xf32>
    %116 = vector.shape_cast %115 : vector<1x3x256xf32> to vector<3x256xf32>
    %117 = vector.shape_cast %114 : vector<3x256xf32> to vector<1x3x256xf32>
    tpu.vector_store %arg11[%c0_53, %c0_54, %c0_55], %117 {strides = array<i32>} : memref<1x3x256xf32, #tpu.memory_space<vmem>>, vector<1x3x256xf32>,
    return
  }
  func.func @transform_0(%arg0: i32, %arg1: i32) -> (i32, i32, i32) {
    %c0_i32 = arith.constant 0 : i32
    %c0_i32_0 = arith.constant 0 : i32
    return %arg0, %c0_i32, %arg1 : i32, i32, i32
  }
  func.func @transform_1(%arg0: i32, %arg1: i32) -> (i32, i32, i32) {
    %c0_i32 = arith.constant 0 : i32
    %c0_i32_0 = arith.constant 0 : i32
    %c0_i32_1 = arith.constant 0 : i32
    return %arg0, %c0_i32, %c0_i32_0 : i32, i32, i32
  }
  func.func @transform_2(%arg0: i32, %arg1: i32) -> (i32, i32) {
    %c0_i32 = arith.constant 0 : i32
    %c0_i32_0 = arith.constant 0 : i32
    %c0_i32_1 = arith.constant 0 : i32
    return %c0_i32, %c0_i32_0 : i32, i32
  }
  func.func @transform_3(%arg0: i32, %arg1: i32) -> (i32, i32, i32) {
    %c0_i32 = arith.constant 0 : i32
    %c0_i32_0 = arith.constant 0 : i32
    %c0_i32_1 = arith.constant 0 : i32
    %c0_i32_2 = arith.constant 0 : i32
    return %c0_i32, %c0_i32_0, %c0_i32_1 : i32, i32, i32
  }
  func.func @transform_4(%arg0: i32, %arg1: i32) -> (i32, i32, i32) {
    %c0_i32 = arith.constant 0 : i32
    %c0_i32_0 = arith.constant 0 : i32
    %c0_i32_1 = arith.constant 0 : i32
    %c0_i32_2 = arith.constant 0 : i32
    return %c0_i32, %c0_i32_0, %c0_i32_1 : i32, i32, i32
  }
  func.func @transform_5(%arg0: i32, %arg1: i32) -> (i32, i32, i32) {
    %c0_i32 = arith.constant 0 : i32
    %c0_i32_0 = arith.constant 0 : i32
    %c0_i32_1 = arith.constant 0 : i32
    %c0_i32_2 = arith.constant 0 : i32
    return %c0_i32, %c0_i32_0, %c0_i32_1 : i32, i32, i32
  }
  func.func @transform_6(%arg0: i32, %arg1: i32) -> (i32, i32, i32) {
    %c0_i32 = arith.constant 0 : i32
    %c0_i32_0 = arith.constant 0 : i32
    %c0_i32_1 = arith.constant 0 : i32
    %c0_i32_2 = arith.constant 0 : i32
    return %c0_i32, %c0_i32_0, %c0_i32_1 : i32, i32, i32
  }
  func.func @transform_7(%arg0: i32, %arg1: i32) -> (i32, i32) {
    %c0_i32 = arith.constant 0 : i32
    %c0_i32_0 = arith.constant 0 : i32
    %c0_i32_1 = arith.constant 0 : i32
    return %c0_i32, %c0_i32_0 : i32, i32
  }
  func.func @transform_8(%arg0: i32, %arg1: i32) -> (i32, i32) {
    %c0_i32 = arith.constant 0 : i32
    %c0_i32_0 = arith.constant 0 : i32
    %c0_i32_1 = arith.constant 0 : i32
    return %c0_i32, %c0_i32_0 : i32, i32
  }
  func.func @transform_9(%arg0: i32, %arg1: i32) -> (i32, i32, i32) {
    %c0_i32 = arith.constant 0 : i32
    %c0_i32_0 = arith.constant 0 : i32
    return %arg0, %c0_i32, %arg1 : i32, i32, i32
  }
}

</mosaic_0001>

<llo_original>
// kernel: tpu_custom_call.1
$region0: #{tpu_custom_call.1}
  #allocation0 [shape = 'u32[]', space=smem, size = 0x4, offset = 0x4, fixed_abs, tag = 'smem constant byte address 0x4 - core index']
  #allocation1 [shape = 'u32[144,128]{1,0:T(1,128)}', space=vmem, size = 0x12000, scoped, tag = 'internal scratch']
  %s0 = inlined_call_operand.vmem [shape: f32[2,3,256], index: 0, kind: input, shape index: {}]
  %s1 = inlined_call_operand.vmem [shape: f32[2,32,1], index: 1, kind: input, shape index: {}]
  %s2 = inlined_call_operand.vmem [shape: f32[32,3], index: 2, kind: input, shape index: {}]
  %s3 = inlined_call_operand.vmem [shape: f32[2,32,32], index: 3, kind: input, shape index: {}]
  %s4 = inlined_call_operand.vmem [shape: f32[2,32,1], index: 4, kind: input, shape index: {}]
  %s5 = inlined_call_operand.vmem [shape: f32[2,32,32], index: 5, kind: input, shape index: {}]
  %s6 = inlined_call_operand.vmem [shape: f32[2,32,1], index: 6, kind: input, shape index: {}]
  %s7 = inlined_call_operand.vmem [shape: f32[3,32], index: 7, kind: input, shape index: {}]
  %s8 = inlined_call_operand.vmem [shape: f32[3,3], index: 8, kind: input, shape index: {}]
  %s9 = inlined_call_operand.vmem [shape: f32[2,3,256], index: 9, kind: output, shape index: {}]
  %s10 = sld [smem:[#allocation0]]
  $region69: #{tpu_custom_call.1} parent=0
    _
  %s12 = ssub.s32 1, %s10
  %s13 = scalar_select 0, %s12, %s10
  loop: start=0, step=1, limit=4
  $region2: #{tpu_custom_call.1} parent=0 // loop_pre_header
    _
  $region3: #{tpu_custom_call.1} parent=0 // loop_header
    %s15 = sphi 0, %s19
    %p16 = scmp.ge.s32.totalorder %s15, 4
    %s22 = sphi 0, %s34
    %s23 = sphi 0, %s30
    %s24 = sphi 0, %s22
    %s25 = sphi 0, %s23
    %s26 = sphi 0, %s24
    %s27 = sphi 0, %s25
    %s39 = sphi 0, %s41
    %s42 = sphi 0, %s39
    %s43 = sphi 0, %s42
    %s59 = sphi 0, %s43
    %s65 = sphi 0, %s67
    %s68 = sphi 0, %s65
    %s69 = sphi 0, %s68
    %s85 = sphi 0, %s69
    %s89 = sphi 0, %s89
    %s91 = sphi 0, %s89
    %s92 = sphi 0, %s91
    %s106 = sphi 0, %s92
    %s110 = sphi 0, %s110
    %s112 = sphi 0, %s110
    %s113 = sphi 0, %s112
    %s127 = sphi 0, %s113
    %s131 = sphi 0, %s131
    %s133 = sphi 0, %s131
    %s134 = sphi 0, %s133
    %s148 = sphi 0, %s134
    %s152 = sphi 0, %s152
    %s154 = sphi 0, %s152
    %s155 = sphi 0, %s154
    %s169 = sphi 0, %s155
    %s173 = sphi 0, %s173
    %s175 = sphi 0, %s173
    %s176 = sphi 0, %s175
    %s190 = sphi 0, %s176
    %s194 = sphi 0, %s194
    %s196 = sphi 0, %s194
    %s197 = sphi 0, %s196
    %s211 = sphi 0, %s197
    %s215 = sphi 0, %s215
    %s217 = sphi 0, %s215
    %s218 = sphi 0, %s217
    %s232 = sphi 0, %s218
    %s240 = sphi 0, %s242
    %s243 = sphi 0, %s240
    %s244 = sphi 0, %s243
    %s260 = sphi 0, %s244
  $region4: #{tpu_custom_call.1} parent=0 // loop_header_branch
    %18 = sbr.rel (%p16) target = $region8
  $region5: #{tpu_custom_call.1} parent=0 // loop_body
    %s20 = ssub.s32 %s15, 1
    %s21 = ssub.s32 %s15, 2
    %s28 = sadd.s32 1, %s23
    %p29 = scmp.ge.s32.totalorder %s28, 1
    %s30 = scalar_select %p29, 0, %s28
    %s31 = sadd.s32 1, %s22
    %s32 = scalar_select %p29, %s31, %s22
    %p33 = scmp.ge.s32.totalorder %s32, 2
    %s34 = scalar_select %p33, 0, %s32
    %s35 = ssub.s32 %s22, %s34
    %s36 = ssub.s32 %s23, %s30
    %s37 = sor.u32 %s35, %s36
    %p38 = scmp.eq.s32.totalorder %s37, 0
    %s40 = sadd.s32 %s39, 1
    %s41 = scalar_select %p38, %s39, %s40
    %p44 = pneg %p38
    %p45 = scmp.eq.s32.totalorder %s15, 1
    %p46 = por %p44, %p45
    %p47 = scmp.ne.s32.totalorder %s39, %s42
    %p48 = scmp.eq.s32.totalorder %s15, 0
    %p49 = por %p47, %p48
    %p50 = scmp.ne.s32.totalorder %s39, %s42
    %p51 = scmp.eq.s32.totalorder %s20, 1
    %p52 = por %p50, %p51
    %p53 = scmp.ne.s32.totalorder %s42, %s43
    %p54 = scmp.eq.s32.totalorder %s20, 0
    %p55 = por %p53, %p54
    %p56 = scmp.ne.s32.totalorder %s42, %s43
    %p57 = scmp.eq.s32.totalorder %s21, 1
    %p58 = por %p56, %p57
    %p60 = scmp.ne.s32.totalorder %s43, %s59
    %p61 = scmp.eq.s32.totalorder %s21, 0
    %p62 = por %p60, %p61
    %s63 = ssub.s32 %s22, %s34
    %p64 = scmp.eq.s32.totalorder %s63, 0
    %s66 = sadd.s32 %s65, 1
    %s67 = scalar_select %p64, %s65, %s66
    %p70 = pneg %p64
    %p71 = scmp.eq.s32.totalorder %s15, 1
    %p72 = por %p70, %p71
    %p73 = scmp.ne.s32.totalorder %s65, %s68
    %p74 = scmp.eq.s32.totalorder %s15, 0
    %p75 = por %p73, %p74
    %p76 = scmp.ne.s32.totalorder %s65, %s68
    %p77 = scmp.eq.s32.totalorder %s20, 1
    %p78 = por %p76, %p77
    %p79 = scmp.ne.s32.totalorder %s68, %s69
    %p80 = scmp.eq.s32.totalorder %s20, 0
    %p81 = por %p79, %p80
    %p82 = scmp.ne.s32.totalorder %s68, %s69
    %p83 = scmp.eq.s32.totalorder %s21, 1
    %p84 = por %p82, %p83
    %p86 = scmp.ne.s32.totalorder %s69, %s85
    %p87 = scmp.eq.s32.totalorder %s21, 0
    %p88 = por %p86, %p87
    %s90 = sadd.s32 %s89, 1
    %p93 = scmp.eq.s32.totalorder %s15, 1
    %p94 = scmp.ne.s32.totalorder %s89, %s91
    %p95 = scmp.eq.s32.totalorder %s15, 0
    %p96 = por %p94, %p95
    %p97 = scmp.ne.s32.totalorder %s89, %s91
    %p98 = scmp.eq.s32.totalorder %s20, 1
    %p99 = por %p97, %p98
    %p100 = scmp.ne.s32.totalorder %s91, %s92
    %p101 = scmp.eq.s32.totalorder %s20, 0
    %p102 = por %p100, %p101
    %p103 = scmp.ne.s32.totalorder %s91, %s92
    %p104 = scmp.eq.s32.totalorder %s21, 1
    %p105 = por %p103, %p104
    %p107 = scmp.ne.s32.totalorder %s92, %s106
    %p108 = scmp.eq.s32.totalorder %s21, 0
    %p109 = por %p107, %p108
    %s111 = sadd.s32 %s110, 1
    %p114 = scmp.eq.s32.totalorder %s15, 1
    %p115 = scmp.ne.s32.totalorder %s110, %s112
    %p116 = scmp.eq.s32.totalorder %s15, 0
    %p117 = por %p115, %p116
    %p118 = scmp.ne.s32.totalorder %s110, %s112
    %p119 = scmp.eq.s32.totalorder %s20, 1
    %p120 = por %p118, %p119
    %p121 = scmp.ne.s32.totalorder %s112, %s113
    %p122 = scmp.eq.s32.totalorder %s20, 0
    %p123 = por %p121, %p122
    %p124 = scmp.ne.s32.totalorder %s112, %s113
    %p125 = scmp.eq.s32.totalorder %s21, 1
    %p126 = por %p124, %p125
    %p128 = scmp.ne.s32.totalorder %s113, %s127
    %p129 = scmp.eq.s32.totalorder %s21, 0
    %p130 = por %p128, %p129
    %s132 = sadd.s32 %s131, 1
    %p135 = scmp.eq.s32.totalorder %s15, 1
    %p136 = scmp.ne.s32.totalorder %s131, %s133
    %p137 = scmp.eq.s32.totalorder %s15, 0
    %p138 = por %p136, %p137
    %p139 = scmp.ne.s32.totalorder %s131, %s133
    %p140 = scmp.eq.s32.totalorder %s20, 1
    %p141 = por %p139, %p140
    %p142 = scmp.ne.s32.totalorder %s133, %s134
    %p143 = scmp.eq.s32.totalorder %s20, 0
    %p144 = por %p142, %p143
    %p145 = scmp.ne.s32.totalorder %s133, %s134
    %p146 = scmp.eq.s32.totalorder %s21, 1
    %p147 = por %p145, %p146
    %p149 = scmp.ne.s32.totalorder %s134, %s148
    %p150 = scmp.eq.s32.totalorder %s21, 0
    %p151 = por %p149, %p150
    %s153 = sadd.s32 %s152, 1
    %p156 = scmp.eq.s32.totalorder %s15, 1
    %p157 = scmp.ne.s32.totalorder %s152, %s154
    %p158 = scmp.eq.s32.totalorder %s15, 0
    %p159 = por %p157, %p158
    %p160 = scmp.ne.s32.totalorder %s152, %s154
    %p161 = scmp.eq.s32.totalorder %s20, 1
    %p162 = por %p160, %p161
    %p163 = scmp.ne.s32.totalorder %s154, %s155
    %p164 = scmp.eq.s32.totalorder %s20, 0
    %p165 = por %p163, %p164
    %p166 = scmp.ne.s32.totalorder %s154, %s155
    %p167 = scmp.eq.s32.totalorder %s21, 1
    %p168 = por %p166, %p167
    %p170 = scmp.ne.s32.totalorder %s155, %s169
    %p171 = scmp.eq.s32.totalorder %s21, 0
    %p172 = por %p170, %p171
    %s174 = sadd.s32 %s173, 1
    %p177 = scmp.eq.s32.totalorder %s15, 1
    %p178 = scmp.ne.s32.totalorder %s173, %s175
    %p179 = scmp.eq.s32.totalorder %s15, 0
    %p180 = por %p178, %p179
    %p181 = scmp.ne.s32.totalorder %s173, %s175
    %p182 = scmp.eq.s32.totalorder %s20, 1
    %p183 = por %p181, %p182
    %p184 = scmp.ne.s32.totalorder %s175, %s176
    %p185 = scmp.eq.s32.totalorder %s20, 0
    %p186 = por %p184, %p185
    %p187 = scmp.ne.s32.totalorder %s175, %s176
    %p188 = scmp.eq.s32.totalorder %s21, 1
    %p189 = por %p187, %p188
    %p191 = scmp.ne.s32.totalorder %s176, %s190
    %p192 = scmp.eq.s32.totalorder %s21, 0
    %p193 = por %p191, %p192
    %s195 = sadd.s32 %s194, 1
    %p198 = scmp.eq.s32.totalorder %s15, 1
    %p199 = scmp.ne.s32.totalorder %s194, %s196
    %p200 = scmp.eq.s32.totalorder %s15, 0
    %p201 = por %p199, %p200
    %p202 = scmp.ne.s32.totalorder %s194, %s196
    %p203 = scmp.eq.s32.totalorder %s20, 1
    %p204 = por %p202, %p203
    %p205 = scmp.ne.s32.totalorder %s196, %s197
    %p206 = scmp.eq.s32.totalorder %s20, 0
    %p207 = por %p205, %p206
    %p208 = scmp.ne.s32.totalorder %s196, %s197
    %p209 = scmp.eq.s32.totalorder %s21, 1
    %p210 = por %p208, %p209
    %p212 = scmp.ne.s32.totalorder %s197, %s211
    %p213 = scmp.eq.s32.totalorder %s21, 0
    %p214 = por %p212, %p213
    %s216 = sadd.s32 %s215, 1
    %p219 = scmp.eq.s32.totalorder %s15, 1
    %p220 = scmp.ne.s32.totalorder %s215, %s217
    %p221 = scmp.eq.s32.totalorder %s15, 0
    %p222 = por %p220, %p221
    %p223 = scmp.ne.s32.totalorder %s215, %s217
    %p224 = scmp.eq.s32.totalorder %s20, 1
    %p225 = por %p223, %p224
    %p226 = scmp.ne.s32.totalorder %s217, %s218
    %p227 = scmp.eq.s32.totalorder %s20, 0
    %p228 = por %p226, %p227
    %p229 = scmp.ne.s32.totalorder %s217, %s218
    %p230 = scmp.eq.s32.totalorder %s21, 1
    %p231 = por %p229, %p230
    %p233 = scmp.ne.s32.totalorder %s218, %s232
    %p234 = scmp.eq.s32.totalorder %s21, 0
    %p235 = por %p233, %p234
    %s236 = ssub.s32 %s22, %s34
    %s237 = ssub.s32 %s23, %s30
    %s238 = sor.u32 %s236, %s237
    %p239 = scmp.eq.s32.totalorder %s238, 0
    %s241 = sadd.s32 %s240, 1
    %s242 = scalar_select %p239, %s240, %s241
    %p245 = pneg %p239
    %p246 = scmp.eq.s32.totalorder %s15, 1
    %p247 = por %p245, %p246
    %p248 = scmp.ne.s32.totalorder %s240, %s243
    %p249 = scmp.eq.s32.totalorder %s15, 0
    %p250 = por %p248, %p249
    %p251 = scmp.ne.s32.totalorder %s240, %s243
    %p252 = scmp.eq.s32.totalorder %s20, 1
    %p253 = por %p251, %p252
    %p254 = scmp.ne.s32.totalorder %s243, %s244
    %p255 = scmp.eq.s32.totalorder %s20, 0
    %p256 = por %p254, %p255
    %p257 = scmp.ne.s32.totalorder %s243, %s244
    %p258 = scmp.eq.s32.totalorder %s21, 1
    %p259 = por %p257, %p258
    %p261 = scmp.ne.s32.totalorder %s244, %s260
    %p262 = scmp.eq.s32.totalorder %s21, 0
    %p263 = por %p261, %p262
    %p264 = scmp.le.s32.totalorder 1, %s15
    %p265 = scmp.lt.s32.totalorder %s15, 3
    %p266 = pnand %p264, %p265
    %p267 = pneg %p266
    // Predicated region
    $region9: #{tpu_custom_call.1} parent=5 // pred_check
      _
    $region10: #{tpu_custom_call.1} parent=5 // pred_check_branch
      %269 = sbr.rel (%p266) target = $region12
    $region11: #{tpu_custom_call.1} parent=5 // pred_region
      %s270 = ssub.s32 %s15, 1
      // Predicated region
      $region13: #{tpu_custom_call.1} parent=11 // pred_check
        %p271 = pneg %p102
      $region14: #{tpu_custom_call.1} parent=11 // pred_check_branch
        %273 = sbr.rel (%p271) target = $region16
      $region15: #{tpu_custom_call.1} parent=11 // pred_region
        _
      $region16: #{tpu_custom_call.1} parent=11 // pred_fallthru
        _
      // Predicated region
      $region17: #{tpu_custom_call.1} parent=11 // pred_check
        %p274 = pneg %p123
      $region18: #{tpu_custom_call.1} parent=11 // pred_check_branch
        %276 = sbr.rel (%p274) target = $region20
      $region19: #{tpu_custom_call.1} parent=11 // pred_region
        _
      $region20: #{tpu_custom_call.1} parent=11 // pred_fallthru
        _
      // Predicated region
      $region21: #{tpu_custom_call.1} parent=11 // pred_check
        %p277 = pneg %p144
      $region22: #{tpu_custom_call.1} parent=11 // pred_check_branch
        %279 = sbr.rel (%p277) target = $region24
      $region23: #{tpu_custom_call.1} parent=11 // pred_region
        _
      $region24: #{tpu_custom_call.1} parent=11 // pred_fallthru
        _
      // Predicated region
      $region25: #{tpu_custom_call.1} parent=11 // pred_check
        %p280 = pneg %p165
      $region26: #{tpu_custom_call.1} parent=11 // pred_check_branch
        %282 = sbr.rel (%p280) target = $region28
      $region27: #{tpu_custom_call.1} parent=11 // pred_region
        _
      $region28: #{tpu_custom_call.1} parent=11 // pred_fallthru
        _
      // Predicated region
      $region29: #{tpu_custom_call.1} parent=11 // pred_check
        %p283 = pneg %p186
      $region30: #{tpu_custom_call.1} parent=11 // pred_check_branch
        %285 = sbr.rel (%p283) target = $region32
      $region31: #{tpu_custom_call.1} parent=11 // pred_region
        _
      $region32: #{tpu_custom_call.1} parent=11 // pred_fallthru
        _
      // Predicated region
      $region33: #{tpu_custom_call.1} parent=11 // pred_check
        %p286 = pneg %p207
      $region34: #{tpu_custom_call.1} parent=11 // pred_check_branch
        %288 = sbr.rel (%p286) target = $region36
      $region35: #{tpu_custom_call.1} parent=11 // pred_region
        _
      $region36: #{tpu_custom_call.1} parent=11 // pred_fallthru
        _
      // Predicated region
      $region37: #{tpu_custom_call.1} parent=11 // pred_check
        %p289 = pneg %p228
      $region38: #{tpu_custom_call.1} parent=11 // pred_check_branch
        %291 = sbr.rel (%p289) target = $region40
      $region39: #{tpu_custom_call.1} parent=11 // pred_region
        _
      $region40: #{tpu_custom_call.1} parent=11 // pred_fallthru
        _
    $region12: #{tpu_custom_call.1} parent=5 // pred_fallthru
      _
    %p292 = scmp.lt.s32.totalorder %s15, 2
    // Predicated region
    $region41: #{tpu_custom_call.1} parent=5 // pred_check
      %p293 = pneg %p292
    $region42: #{tpu_custom_call.1} parent=5 // pred_check_branch
      %295 = sbr.rel (%p293) target = $region44
    $region43: #{tpu_custom_call.1} parent=5 // pred_region
      // Predicated region
      $region45: #{tpu_custom_call.1} parent=43 // pred_check
        %p296 = pneg %p49
      $region46: #{tpu_custom_call.1} parent=43 // pred_check_branch
        %298 = sbr.rel (%p296) target = $region48
      $region47: #{tpu_custom_call.1} parent=43 // pred_region
        %s299 = smul.u32 2, %s23
        %p300 = scmp.lt.s32.totalorder %s22, 1
        %s301 = scalar_select %p300, %s22, 1
        %p302 = scmp.lt.s32.totalorder %s299, 1
        %s303 = scalar_select %p302, %s299, 1
        %s304 = smul.addr %s301, 2
        %s305 = sadd.s32 %s303, %s304
        %s306 = smul.addr %s305, 4
        %s307 = scalar_lea.vmem %s0, %s306
        %s308 = smul.u32 2, %s23
      $region48: #{tpu_custom_call.1} parent=43 // pred_fallthru
        _
      // Predicated region
      $region49: #{tpu_custom_call.1} parent=43 // pred_check
        %p309 = pneg %p75
      $region50: #{tpu_custom_call.1} parent=43 // pred_check_branch
        %311 = sbr.rel (%p309) target = $region52
      $region51: #{tpu_custom_call.1} parent=43 // pred_region
        %p312 = scmp.lt.s32.totalorder %s22, 1
        %s313 = scalar_select %p312, %s22, 1
        %s314 = smul.addr %s313, 4
        %s315 = smul.addr %s314, 8
        %s316 = scalar_lea.vmem %s1, %s315
      $region52: #{tpu_custom_call.1} parent=43 // pred_fallthru
        _
    $region44: #{tpu_custom_call.1} parent=5 // pred_fallthru
      _
    %p317 = scmp.le.s32.totalorder 1, %s15
    %p318 = scmp.lt.s32.totalorder %s15, 3
    %p319 = pnand %p317, %p318
    %p320 = pneg %p319
    // Predicated region
    $region53: #{tpu_custom_call.1} parent=5 // pred_check
      _
    $region54: #{tpu_custom_call.1} parent=5 // pred_check_branch
      %322 = sbr.rel (%p319) target = $region56
    $region55: #{tpu_custom_call.1} parent=5 // pred_region
      %s323 = ssub.s32 %s15, 1
      %s324 = smul.u32 2, %s25
      %p325 = scmp.lt.s32.totalorder %s24, 1
      %s326 = scalar_select %p325, %s24, 1
      %p327 = scmp.lt.s32.totalorder %s324, 1
      %s328 = scalar_select %p327, %s324, 1
      %s329 = smul.addr %s326, 2
      %s330 = sadd.s32 %s328, %s329
      %s331 = smul.addr %s330, 4
      %s332 = scalar_lea.vmem %s0, %s331
      %p333 = pneg %p55
      %p334 = pneg %p52
      %p335 = scmp.lt.s32.totalorder %s24, 1
      %s336 = scalar_select %p335, %s24, 1
      %s337 = smul.addr %s336, 4
      %s338 = smul.addr %s337, 8
      %s339 = scalar_lea.vmem %s1, %s338
      %p340 = pneg %p81
      %p341 = pneg %p78
      %p342 = pneg %p102
      %p343 = pneg %p99
      %p344 = pneg %p123
      %p345 = pneg %p120
      %p346 = pneg %p144
      %p347 = pneg %p141
      %p348 = pneg %p165
      %p349 = pneg %p162
      %p350 = pneg %p186
      %p351 = pneg %p183
      %p352 = pneg %p207
      %p353 = pneg %p204
      %p354 = pneg %p228
      %p355 = pneg %p225
      %p356 = pneg %p256
      %p357 = pneg %p253
      %s358 = smul.u32 2, %s25
      %p359 = scmp.lt.s32.totalorder %s24, 1
      %s360 = scalar_select %p359, %s24, 1
      %p361 = scmp.lt.s32.totalorder %s358, 1
      %s362 = scalar_select %p361, %s358, 1
      %s363 = smul.addr %s360, 2
      %s364 = sadd.s32 %s362, %s363
      %s365 = smul.addr %s364, 4
      %s366 = scalar_lea.vmem %s9, %s365
      %s367 = smul.u32 2, %s25
      %p368 = scmp.lt.s32.totalorder %s24, 1
      %s369 = scalar_select %p368, %s24, 1
      %p370 = scmp.lt.s32.totalorder %s367, 1
      %s371 = scalar_select %p370, %s367, 1
      %s372 = smul.addr %s369, 2
      %s373 = sadd.s32 %s371, %s372
      %s374 = smul.addr %s373, 4
      %s375 = scalar_lea.vmem %s0, %s374
      %s376 = smul.u32 2, %s25
      %p377 = scmp.lt.s32.totalorder %s24, 1
      %s378 = scalar_select %p377, %s24, 1
      %s379 = smul.addr %s378, 4
      %s380 = smul.addr %s379, 8
      %s381 = scalar_lea.vmem %s1, %s380
      %s382 = smul.u32 2, %s25
      %p383 = scmp.lt.s32.totalorder %s24, 1
      %s384 = scalar_select %p383, %s24, 1
      %p385 = scmp.lt.s32.totalorder %s382, 1
      %s386 = scalar_select %p385, %s382, 1
      %s387 = smul.addr %s384, 2
      %s388 = sadd.s32 %s386, %s387
      %s389 = smul.addr %s388, 4
      %s390 = scalar_lea.vmem %s9, %s389
      %s391 = smul.u32 2, %s25
      %v392 = vld [vmem:[%s375] sm:$0x77]
      %v393 = vld [vmem:[%s2] sm:$0xff]
      %v394 = vld [vmem:[%s2 + $0x8] sm:$0xff]
      %v395 = vld [vmem:[%s2 + $0x10] sm:$0xff]
      %v396 = vld [vmem:[%s2 + $0x18] sm:$0xff]
      %v397 = vld [vmem:[%s381] sm:$0xff]
      %v398 = vld [vmem:[%s381 + $0x8] sm:$0xff]
      %v399 = vld [vmem:[%s381 + $0x10] sm:$0xff]
      %v400 = vld [vmem:[%s381 + $0x18] sm:$0xff]
      %402 = vset.pattern.permute.xlu0 0
      %403 = vperm.xlu0 %402, %v393
      %v404 = vpop.permute.xlu0 %403
      %407 = vset.pattern.permute.xlu0 0
      %408 = vperm.xlu0 %407, %v394
      %v409 = vpop.permute.xlu0 %408
      %412 = vset.pattern.permute.xlu0 0
      %413 = vperm.xlu0 %412, %v395
      %v414 = vpop.permute.xlu0 %413
      %417 = vset.pattern.permute.xlu0 0
      %418 = vperm.xlu0 %417, %v396
      %v419 = vpop.permute.xlu0 %418
      %v422 = vlaneseq
      %v423 = vshrl.u32 %v422, 7
      %v424 = vsub.s32 0, %v423
      %v425 = vrot.slane %v392, %v424
      %v426 = vlaneseq
      %v427 = vshrl.u32 %v426, 7
      %v428 = vsub.s32 4, %v427
      %v429 = vrot.slane %v392, %v428
      %v432 = vlaneseq
      %v433 = vshrl.u32 %v432, 7
      %v434 = vsub.s32 0, %v433
      %v435 = vrot.slane %v425, %v434
      %v436 = vlaneseq
      %v437 = vshrl.u32 %v436, 7
      %v438 = vsub.s32 0, %v437
      %v439 = vrot.slane %v429, %v438
      %v440 = vmul.f32 %v404, %v435
      %v441 = vmul.f32 %v404, %v439
      %v442 = vmul.f32 %v409, %v435
      %v443 = vmul.f32 %v409, %v439
      %v444 = vmul.f32 %v414, %v435
      %v445 = vmul.f32 %v414, %v439
      %v446 = vmul.f32 %v419, %v435
      %v447 = vmul.f32 %v419, %v439
      %449 = vset.pattern.permute.xlu0 0
      %450 = vperm.xlu0 %449, %v397
      %v451 = vpop.permute.xlu0 %450
      %454 = vset.pattern.permute.xlu0 0
      %455 = vperm.xlu0 %454, %v398
      %v456 = vpop.permute.xlu0 %455
      %459 = vset.pattern.permute.xlu0 0
      %460 = vperm.xlu0 %459, %v399
      %v461 = vpop.permute.xlu0 %460
      %464 = vset.pattern.permute.xlu0 0
      %465 = vperm.xlu0 %464, %v400
      %v466 = vpop.permute.xlu0 %465
      %v468 = vadd.f32 %v451, %v440
      %v469 = vadd.f32 %v451, %v441
      %v470 = vadd.f32 %v456, %v442
      %v471 = vadd.f32 %v456, %v443
      %v472 = vadd.f32 %v461, %v444
      %v473 = vadd.f32 %v461, %v445
      %v474 = vadd.f32 %v466, %v446
      %v475 = vadd.f32 %v466, %v447
      %476 = vset.pattern.permute.xlu0 1
      %477 = vperm.xlu0 %476, %v393
      %v478 = vpop.permute.xlu0 %477
      %480 = vset.pattern.permute.xlu0 1
      %481 = vperm.xlu0 %480, %v394
      %v482 = vpop.permute.xlu0 %481
      %484 = vset.pattern.permute.xlu0 1
      %485 = vperm.xlu0 %484, %v395
      %v486 = vpop.permute.xlu0 %485
      %488 = vset.pattern.permute.xlu0 1
      %489 = vperm.xlu0 %488, %v396
      %v490 = vpop.permute.xlu0 %489
      %v492 = vlaneseq
      %v493 = vshrl.u32 %v492, 7
      %v494 = vsub.s32 1, %v493
      %v495 = vrot.slane %v392, %v494
      %v496 = vlaneseq
      %v497 = vshrl.u32 %v496, 7
      %v498 = vsub.s32 5, %v497
      %v499 = vrot.slane %v392, %v498
      %v502 = vlaneseq
      %v503 = vshrl.u32 %v502, 7
      %v504 = vsub.s32 1, %v503
      %v505 = vrot.slane %v495, %v504
      %v506 = vlaneseq
      %v507 = vshrl.u32 %v506, 7
      %v508 = vsub.s32 1, %v507
      %v509 = vrot.slane %v499, %v508
      %v510 = vmul.f32 %v478, %v505
      %v511 = vmul.f32 %v478, %v509
      %v512 = vmul.f32 %v482, %v505
      %v513 = vmul.f32 %v482, %v509
      %v514 = vmul.f32 %v486, %v505
      %v515 = vmul.f32 %v486, %v509
      %v516 = vmul.f32 %v490, %v505
      %v517 = vmul.f32 %v490, %v509
      %v518 = vadd.f32 %v468, %v510
      %v519 = vadd.f32 %v469, %v511
      %v520 = vadd.f32 %v470, %v512
      %v521 = vadd.f32 %v471, %v513
      %v522 = vadd.f32 %v472, %v514
      %v523 = vadd.f32 %v473, %v515
      %v524 = vadd.f32 %v474, %v516
      %v525 = vadd.f32 %v475, %v517
      %526 = vset.pattern.permute.xlu0 2
      %527 = vperm.xlu0 %526, %v393
      %v528 = vpop.permute.xlu0 %527
      %530 = vset.pattern.permute.xlu0 2
      %531 = vperm.xlu0 %530, %v394
      %v532 = vpop.permute.xlu0 %531
      %534 = vset.pattern.permute.xlu0 2
      %535 = vperm.xlu0 %534, %v395
      %v536 = vpop.permute.xlu0 %535
      %538 = vset.pattern.permute.xlu0 2
      %539 = vperm.xlu0 %538, %v396
      %v540 = vpop.permute.xlu0 %539
      %v542 = vlaneseq
      %v543 = vshrl.u32 %v542, 7
      %v544 = vsub.s32 2, %v543
      %v545 = vrot.slane %v392, %v544
      %v546 = vlaneseq
      %v547 = vshrl.u32 %v546, 7
      %v548 = vsub.s32 6, %v547
      %v549 = vrot.slane %v392, %v548
      %v552 = vlaneseq
      %v553 = vshrl.u32 %v552, 7
      %v554 = vsub.s32 2, %v553
      %v555 = vrot.slane %v545, %v554
      %v556 = vlaneseq
      %v557 = vshrl.u32 %v556, 7
      %v558 = vsub.s32 2, %v557
      %v559 = vrot.slane %v549, %v558
      %v560 = vmul.f32 %v528, %v555
      %v561 = vmul.f32 %v528, %v559
      %v562 = vmul.f32 %v532, %v555
      %v563 = vmul.f32 %v532, %v559
      %v564 = vmul.f32 %v536, %v555
      %v565 = vmul.f32 %v536, %v559
      %v566 = vmul.f32 %v540, %v555
      %v567 = vmul.f32 %v540, %v559
      %v568 = vadd.f32 %v518, %v560
      %v569 = vadd.f32 %v519, %v561
      %v570 = vadd.f32 %v520, %v562
      %v571 = vadd.f32 %v521, %v563
      %v572 = vadd.f32 %v522, %v564
      %v573 = vadd.f32 %v523, %v565
      %v574 = vadd.f32 %v524, %v566
      %v575 = vadd.f32 %v525, %v567
      %v576 = vld [vmem:[%s3] sm:$0xff]
      %v577 = vld [vmem:[%s3 + $0x8] sm:$0xff]
      %v578 = vld [vmem:[%s3 + $0x10] sm:$0xff]
      %v579 = vld [vmem:[%s3 + $0x18] sm:$0xff]
      %v580 = vld [vmem:[%s4] sm:$0xff]
      %v581 = vld [vmem:[%s4 + $0x8] sm:$0xff]
      %v582 = vld [vmem:[%s4 + $0x10] sm:$0xff]
      %v583 = vld [vmem:[%s4 + $0x18] sm:$0xff]
      %v584 = vld [vmem:[%s5] sm:$0xff]
      %v585 = vld [vmem:[%s5 + $0x8] sm:$0xff]
      %v586 = vld [vmem:[%s5 + $0x10] sm:$0xff]
      %v587 = vld [vmem:[%s5 + $0x18] sm:$0xff]
      %v588 = vld [vmem:[%s6] sm:$0xff]
      %v589 = vld [vmem:[%s6 + $0x8] sm:$0xff]
      %v590 = vld [vmem:[%s6 + $0x10] sm:$0xff]
      %v591 = vld [vmem:[%s6 + $0x18] sm:$0xff]
      %593 = vset.pattern.permute.xlu0 0
      %594 = vperm.xlu0 %593, %v580
      %v595 = vpop.permute.xlu0 %594
      %598 = vset.pattern.permute.xlu0 0
      %599 = vperm.xlu0 %598, %v581
      %v600 = vpop.permute.xlu0 %599
      %603 = vset.pattern.permute.xlu0 0
      %604 = vperm.xlu0 %603, %v582
      %v605 = vpop.permute.xlu0 %604
      %608 = vset.pattern.permute.xlu0 0
      %609 = vperm.xlu0 %608, %v583
      %v610 = vpop.permute.xlu0 %609
      %vm612 = vcmask 261120
      %v614 = vsel %vm612, %v576, 0
      %v617 = vsel %vm612, %v577, 0
      %v620 = vsel %vm612, %v578, 0
      %v623 = vsel %vm612, %v579, 0
      %625 = vmatprep.subr.mxu0 %v569
      %626 = vmatpush1.msra.mxu0 %v568
      %627 = vmatprep.subr.mxu0 %v571
      %628 = vmatpush1.msra.mxu0 %v570
      %629 = vmatprep.subr.mxu0 %v573
      %630 = vmatpush1.msra.mxu0 %v572
      %631 = vmatprep.subr.mxu0 %v575
      %632 = vmatpush1.msra.mxu0 %v574
      %633 = vmatprep.subr.mxu0 0.0
      %634 = vmatpush1.msra.mxu0 0.0
      %635 = vmatprep.subr.mxu0 0.0
      %636 = vmatpush1.msra.mxu0 0.0
      %637 = vmatprep.subr.mxu0 0.0
      %638 = vmatpush1.msra.mxu0 0.0
      %639 = vmatprep.subr.mxu0 0.0
      %640 = vmatpush1.msra.mxu0 0.0
      %641 = vmatprep.subr.mxu0 0.0
      %642 = vmatpush1.msra.mxu0 0.0
      %643 = vmatprep.subr.mxu0 0.0
      %644 = vmatpush1.msra.mxu0 0.0
      %645 = vmatprep.subr.mxu0 0.0
      %646 = vmatpush1.msra.mxu0 0.0
      %647 = vmatprep.subr.mxu0 0.0
      %648 = vmatpush1.msra.mxu0 0.0
      %649 = vmatprep.subr.mxu0 0.0
      %650 = vmatpush1.msra.mxu0 0.0
      %651 = vmatprep.subr.mxu0 0.0
      %652 = vmatpush1.msra.mxu0 0.0
      %653 = vmatprep.subr.mxu0 0.0
      %654 = vmatpush1.msra.mxu0 0.0
      %655 = vmatprep.subr.mxu0 0.0
      %656 = vmatpush1.msra.mxu0 0.0
      %657 = vmatprep.subr.mxu0 0.0
      %658 = vmatpush1.msra.mxu0 0.0
      %659 = vmatprep.subr.mxu0 0.0
      %660 = vmatpush1.msra.mxu0 0.0
      %661 = vmatprep.subr.mxu0 0.0
      %662 = vmatpush1.msra.mxu0 0.0
      %663 = vmatprep.subr.mxu0 0.0
      %664 = vmatpush1.msra.mxu0 0.0
      %665 = vmatprep.subr.mxu0 0.0
      %666 = vmatpush1.msra.mxu0 0.0
      %667 = vmatprep.subr.mxu0 0.0
      %668 = vmatpush1.msra.mxu0 0.0
      %669 = vmatprep.subr.mxu0 0.0
      %670 = vmatpush1.msra.mxu0 0.0
      %671 = vmatprep.subr.mxu0 0.0
      %672 = vmatpush1.msra.mxu0 0.0
      %673 = vmatprep.subr.mxu0 0.0
      %674 = vmatpush1.msra.mxu0 0.0
      %675 = vmatprep.subr.mxu0 0.0
      %676 = vmatpush1.msra.mxu0 0.0
      %677 = vmatprep.subr.mxu0 0.0
      %678 = vmatpush1.msra.mxu0 0.0
      %679 = vmatprep.subr.mxu0 0.0
      %680 = vmatpush1.msra.mxu0 0.0
      %681 = vmatprep.subr.mxu0 0.0
      %682 = vmatpush1.msra.mxu0 0.0
      %683 = vmatprep.subr.mxu0 0.0
      %684 = vmatpush1.msra.mxu0 0.0
      %685 = vmatprep.subr.mxu0 0.0
      %686 = vmatpush1.msra.mxu0 0.0
      %687 = vmatprep.subr.mxu0 0.0
      %688 = vmatpush1.msra.mxu0 0.0
      %689 = vmatprep.mubr.f32.mxu0 0.0
      %690 = vmatmul.mubr.f32.gmra.mrb[0].mxu0 %v614
      %v691 = vpop.f32.mrb[0].mxu0
      %v692 = vadd.f32 %v595, %v691
      %v693 = vpop.f32.mrb[0].mxu0
      %v694 = vadd.f32 %v595, %v693
      %695 = vmatprep.mubr.f32.mxu0 0.0
      %696 = vmatmul.mubr.f32.gmra.mrb[0].mxu0 %v617
      %v697 = vpop.f32.mrb[0].mxu0
      %v698 = vadd.f32 %v600, %v697
      %v699 = vpop.f32.mrb[0].mxu0
      %v700 = vadd.f32 %v600, %v699
      %701 = vmatprep.mubr.f32.mxu0 0.0
      %702 = vmatmul.mubr.f32.gmra.mrb[0].mxu0 %v620
      %v703 = vpop.f32.mrb[0].mxu0
      %v704 = vadd.f32 %v605, %v703
      %v705 = vpop.f32.mrb[0].mxu0
      %v706 = vadd.f32 %v605, %v705
      %707 = vmatprep.mubr.f32.mxu0 0.0
      %708 = vmatmul.mubr.f32.gmra.mrb[0].mxu0 %v623
      %v709 = vpop.f32.mrb[0].mxu0
      %v710 = vadd.f32 %v610, %v709
      %v711 = vpop.f32.mrb[0].mxu0
      %v712 = vadd.f32 %v610, %v711
      %713 = vdwg.mxu0
      %v714 = vmin.f32 %v692, 0.0
      %v715 = vmin.f32 %v694, 0.0
      %v716 = vmin.f32 %v698, 0.0
      %v717 = vmin.f32 %v700, 0.0
      %v718 = vmin.f32 %v704, 0.0
      %v719 = vmin.f32 %v706, 0.0
      %v720 = vmin.f32 %v710, 0.0
      %v721 = vmin.f32 %v712, 0.0
      %v722 = vmul.f32 %v714, 1.442695
      %v723 = vpow.pop %v722
      %v724 = vmul.f32 %v715, 1.442695
      %v725 = vpow.pop %v724
      %v726 = vmul.f32 %v716, 1.442695
      %v727 = vpow.pop %v726
      %v728 = vmul.f32 %v717, 1.442695
      %v729 = vpow.pop %v728
      %v730 = vmul.f32 %v718, 1.442695
      %v731 = vpow.pop %v730
      %v732 = vmul.f32 %v719, 1.442695
      %v733 = vpow.pop %v732
      %v734 = vmul.f32 %v720, 1.442695
      %v735 = vpow.pop %v734
      %v736 = vmul.f32 %v721, 1.442695
      %v737 = vpow.pop %v736
      %vm738 = vcmp.gt.f32.partialorder %v692, 0.0
      %vm739 = vcmp.gt.f32.partialorder %v694, 0.0
      %vm740 = vcmp.gt.f32.partialorder %v698, 0.0
      %vm741 = vcmp.gt.f32.partialorder %v700, 0.0
      %vm742 = vcmp.gt.f32.partialorder %v704, 0.0
      %vm743 = vcmp.gt.f32.partialorder %v706, 0.0
      %vm744 = vcmp.gt.f32.partialorder %v710, 0.0
      %vm745 = vcmp.gt.f32.partialorder %v712, 0.0
      %v746 = vsub.f32 %v723, 1.0
      %v747 = vsub.f32 %v725, 1.0
      %v748 = vsub.f32 %v727, 1.0
      %v749 = vsub.f32 %v729, 1.0
      %v750 = vsub.f32 %v731, 1.0
      %v751 = vsub.f32 %v733, 1.0
      %v752 = vsub.f32 %v735, 1.0
      %v753 = vsub.f32 %v737, 1.0
      %v754 = vsel %vm738, %v692, %v746
      %v755 = vsel %vm739, %v694, %v747
      %v756 = vsel %vm740, %v698, %v748
      %v757 = vsel %vm741, %v700, %v749
      %v758 = vsel %vm742, %v704, %v750
      %v759 = vsel %vm743, %v706, %v751
      %v760 = vsel %vm744, %v710, %v752
      %v761 = vsel %vm745, %v712, %v753
      %763 = vset.pattern.permute.xlu0 0
      %764 = vperm.xlu0 %763, %v588
      %v765 = vpop.permute.xlu0 %764
      %768 = vset.pattern.permute.xlu0 0
      %769 = vperm.xlu0 %768, %v589
      %v770 = vpop.permute.xlu0 %769
      %773 = vset.pattern.permute.xlu0 0
      %774 = vperm.xlu0 %773, %v590
      %v775 = vpop.permute.xlu0 %774
      %778 = vset.pattern.permute.xlu0 0
      %779 = vperm.xlu0 %778, %v591
      %v780 = vpop.permute.xlu0 %779
      %v783 = vsel %vm612, %v584, 0
      %v786 = vsel %vm612, %v585, 0
      %v789 = vsel %vm612, %v586, 0
      %v792 = vsel %vm612, %v587, 0
      %794 = vmatprep.subr.mxu0 %v755
      %795 = vmatpush1.msra.mxu0 %v754
      %796 = vmatprep.subr.mxu0 %v757
      %797 = vmatpush1.msra.mxu0 %v756
      %798 = vmatprep.subr.mxu0 %v759
      %799 = vmatpush1.msra.mxu0 %v758
      %800 = vmatprep.subr.mxu0 %v761
      %801 = vmatpush1.msra.mxu0 %v760
      %802 = vmatprep.subr.mxu0 0.0
      %803 = vmatpush1.msra.mxu0 0.0
      %804 = vmatprep.subr.mxu0 0.0
      %805 = vmatpush1.msra.mxu0 0.0
      %806 = vmatprep.subr.mxu0 0.0
      %807 = vmatpush1.msra.mxu0 0.0
      %808 = vmatprep.subr.mxu0 0.0
      %809 = vmatpush1.msra.mxu0 0.0
      %810 = vmatprep.subr.mxu0 0.0
      %811 = vmatpush1.msra.mxu0 0.0
      %812 = vmatprep.subr.mxu0 0.0
      %813 = vmatpush1.msra.mxu0 0.0
      %814 = vmatprep.subr.mxu0 0.0
      %815 = vmatpush1.msra.mxu0 0.0
      %816 = vmatprep.subr.mxu0 0.0
      %817 = vmatpush1.msra.mxu0 0.0
      %818 = vmatprep.subr.mxu0 0.0
      %819 = vmatpush1.msra.mxu0 0.0
      %820 = vmatprep.subr.mxu0 0.0
      %821 = vmatpush1.msra.mxu0 0.0
      %822 = vmatprep.subr.mxu0 0.0
      %823 = vmatpush1.msra.mxu0 0.0
      %824 = vmatprep.subr.mxu0 0.0
      %825 = vmatpush1.msra.mxu0 0.0
      %826 = vmatprep.subr.mxu0 0.0
      %827 = vmatpush1.msra.mxu0 0.0
      %828 = vmatprep.subr.mxu0 0.0
      %829 = vmatpush1.msra.mxu0 0.0
      %830 = vmatprep.subr.mxu0 0.0
      %831 = vmatpush1.msra.mxu0 0.0
      %832 = vmatprep.subr.mxu0 0.0
      %833 = vmatpush1.msra.mxu0 0.0
      %834 = vmatprep.subr.mxu0 0.0
      %835 = vmatpush1.msra.mxu0 0.0
      %836 = vmatprep.subr.mxu0 0.0
      %837 = vmatpush1.msra.mxu0 0.0
      %838 = vmatprep.subr.mxu0 0.0
      %839 = vmatpush1.msra.mxu0 0.0
      %840 = vmatprep.subr.mxu0 0.0
      %841 = vmatpush1.msra.mxu0 0.0
      %842 = vmatprep.subr.mxu0 0.0
      %843 = vmatpush1.msra.mxu0 0.0
      %844 = vmatprep.subr.mxu0 0.0
      %845 = vmatpush1.msra.mxu0 0.0
      %846 = vmatprep.subr.mxu0 0.0
      %847 = vmatpush1.msra.mxu0 0.0
      %848 = vmatprep.subr.mxu0 0.0
      %849 = vmatpush1.msra.mxu0 0.0
      %850 = vmatprep.subr.mxu0 0.0
      %851 = vmatpush1.msra.mxu0 0.0
      %852 = vmatprep.subr.mxu0 0.0
      %853 = vmatpush1.msra.mxu0 0.0
      %854 = vmatprep.subr.mxu0 0.0
      %855 = vmatpush1.msra.mxu0 0.0
      %856 = vmatprep.subr.mxu0 0.0
      %857 = vmatpush1.msra.mxu0 0.0
      %858 = vmatprep.mubr.f32.mxu0 0.0
      %859 = vmatmul.mubr.f32.gmra.mrb[0].mxu0 %v783
      %v860 = vpop.f32.mrb[0].mxu0
      %v861 = vadd.f32 %v765, %v860
      %v862 = vpop.f32.mrb[0].mxu0
      %v863 = vadd.f32 %v765, %v862
      %864 = vmatprep.mubr.f32.mxu0 0.0
      %865 = vmatmul.mubr.f32.gmra.mrb[0].mxu0 %v786
      %v866 = vpop.f32.mrb[0].mxu0
      %v867 = vadd.f32 %v770, %v866
      %v868 = vpop.f32.mrb[0].mxu0
      %v869 = vadd.f32 %v770, %v868
      %870 = vmatprep.mubr.f32.mxu0 0.0
      %871 = vmatmul.mubr.f32.gmra.mrb[0].mxu0 %v789
      %v872 = vpop.f32.mrb[0].mxu0
      %v873 = vadd.f32 %v775, %v872
      %v874 = vpop.f32.mrb[0].mxu0
      %v875 = vadd.f32 %v775, %v874
      %876 = vmatprep.mubr.f32.mxu0 0.0
      %877 = vmatmul.mubr.f32.gmra.mrb[0].mxu0 %v792
      %v878 = vpop.f32.mrb[0].mxu0
      %v879 = vadd.f32 %v780, %v878
      %v880 = vpop.f32.mrb[0].mxu0
      %v881 = vadd.f32 %v780, %v880
      %882 = vdwg.mxu0
      %v883 = vmin.f32 %v861, 0.0
      %v884 = vmin.f32 %v863, 0.0
      %v885 = vmin.f32 %v867, 0.0
      %v886 = vmin.f32 %v869, 0.0
      %v887 = vmin.f32 %v873, 0.0
      %v888 = vmin.f32 %v875, 0.0
      %v889 = vmin.f32 %v879, 0.0
      %v890 = vmin.f32 %v881, 0.0
      %v891 = vmul.f32 %v883, 1.442695
      %v892 = vpow.pop %v891
      %v893 = vmul.f32 %v884, 1.442695
      %v894 = vpow.pop %v893
      %v895 = vmul.f32 %v885, 1.442695
      %v896 = vpow.pop %v895
      %v897 = vmul.f32 %v886, 1.442695
      %v898 = vpow.pop %v897
      %v899 = vmul.f32 %v887, 1.442695
      %v900 = vpow.pop %v899
      %v901 = vmul.f32 %v888, 1.442695
      %v902 = vpow.pop %v901
      %v903 = vmul.f32 %v889, 1.442695
      %v904 = vpow.pop %v903
      %v905 = vmul.f32 %v890, 1.442695
      %v906 = vpow.pop %v905
      %vm907 = vcmp.gt.f32.partialorder %v861, 0.0
      %vm908 = vcmp.gt.f32.partialorder %v863, 0.0
      %vm909 = vcmp.gt.f32.partialorder %v867, 0.0
      %vm910 = vcmp.gt.f32.partialorder %v869, 0.0
      %vm911 = vcmp.gt.f32.partialorder %v873, 0.0
      %vm912 = vcmp.gt.f32.partialorder %v875, 0.0
      %vm913 = vcmp.gt.f32.partialorder %v879, 0.0
      %vm914 = vcmp.gt.f32.partialorder %v881, 0.0
      %v915 = vsub.f32 %v892, 1.0
      %v916 = vsub.f32 %v894, 1.0
      %v917 = vsub.f32 %v896, 1.0
      %v918 = vsub.f32 %v898, 1.0
      %v919 = vsub.f32 %v900, 1.0
      %v920 = vsub.f32 %v902, 1.0
      %v921 = vsub.f32 %v904, 1.0
      %v922 = vsub.f32 %v906, 1.0
      %v923 = vsel %vm907, %v861, %v915
      %v924 = vsel %vm908, %v863, %v916
      %v925 = vsel %vm909, %v867, %v917
      %v926 = vsel %vm910, %v869, %v918
      %v927 = vsel %vm911, %v873, %v919
      %v928 = vsel %vm912, %v875, %v920
      %v929 = vsel %vm913, %v879, %v921
      %v930 = vsel %vm914, %v881, %v922
      %v931 = vadd.f32 %v568, %v923
      %v932 = vadd.f32 %v569, %v924
      %v933 = vadd.f32 %v570, %v925
      %v934 = vadd.f32 %v571, %v926
      %v935 = vadd.f32 %v572, %v927
      %v936 = vadd.f32 %v573, %v928
      %v937 = vadd.f32 %v574, %v929
      %v938 = vadd.f32 %v575, %v930
      %s939 = scalar_lea.vmem %s3, 32
      %v940 = vld [vmem:[%s939] sm:$0xff]
      %v941 = vld [vmem:[%s939 + $0x8] sm:$0xff]
      %v942 = vld [vmem:[%s939 + $0x10] sm:$0xff]
      %v943 = vld [vmem:[%s939 + $0x18] sm:$0xff]
      %s944 = scalar_lea.vmem %s4, 32
      %v945 = vld [vmem:[%s944] sm:$0xff]
      %v946 = vld [vmem:[%s944 + $0x8] sm:$0xff]
      %v947 = vld [vmem:[%s944 + $0x10] sm:$0xff]
      %v948 = vld [vmem:[%s944 + $0x18] sm:$0xff]
      %s949 = scalar_lea.vmem %s5, 32
      %v950 = vld [vmem:[%s949] sm:$0xff]
      %v951 = vld [vmem:[%s949 + $0x8] sm:$0xff]
      %v952 = vld [vmem:[%s949 + $0x10] sm:$0xff]
      %v953 = vld [vmem:[%s949 + $0x18] sm:$0xff]
      %s954 = scalar_lea.vmem %s6, 32
      %v955 = vld [vmem:[%s954] sm:$0xff]
      %v956 = vld [vmem:[%s954 + $0x8] sm:$0xff]
      %v957 = vld [vmem:[%s954 + $0x10] sm:$0xff]
      %v958 = vld [vmem:[%s954 + $0x18] sm:$0xff]
      %960 = vset.pattern.permute.xlu0 0
      %961 = vperm.xlu0 %960, %v945
      %v962 = vpop.permute.xlu0 %961
      %965 = vset.pattern.permute.xlu0 0
      %966 = vperm.xlu0 %965, %v946
      %v967 = vpop.permute.xlu0 %966
      %970 = vset.pattern.permute.xlu0 0
      %971 = vperm.xlu0 %970, %v947
      %v972 = vpop.permute.xlu0 %971
      %975 = vset.pattern.permute.xlu0 0
      %976 = vperm.xlu0 %975, %v948
      %v977 = vpop.permute.xlu0 %976
      %v980 = vsel %vm612, %v940, 0
      %v983 = vsel %vm612, %v941, 0
      %v986 = vsel %vm612, %v942, 0
      %v989 = vsel %vm612, %v943, 0
      %991 = vmatprep.subr.mxu0 %v932
      %992 = vmatpush1.msra.mxu0 %v931
      %993 = vmatprep.subr.mxu0 %v934
      %994 = vmatpush1.msra.mxu0 %v933
      %995 = vmatprep.subr.mxu0 %v936
      %996 = vmatpush1.msra.mxu0 %v935
      %997 = vmatprep.subr.mxu0 %v938
      %998 = vmatpush1.msra.mxu0 %v937
      %999 = vmatprep.subr.mxu0 0.0
      %1000 = vmatpush1.msra.mxu0 0.0
      %1001 = vmatprep.subr.mxu0 0.0
      %1002 = vmatpush1.msra.mxu0 0.0
      %1003 = vmatprep.subr.mxu0 0.0
      %1004 = vmatpush1.msra.mxu0 0.0
      %1005 = vmatprep.subr.mxu0 0.0
      %1006 = vmatpush1.msra.mxu0 0.0
      %1007 = vmatprep.subr.mxu0 0.0
      %1008 = vmatpush1.msra.mxu0 0.0
      %1009 = vmatprep.subr.mxu0 0.0
      %1010 = vmatpush1.msra.mxu0 0.0
      %1011 = vmatprep.subr.mxu0 0.0
      %1012 = vmatpush1.msra.mxu0 0.0
      %1013 = vmatprep.subr.mxu0 0.0
      %1014 = vmatpush1.msra.mxu0 0.0
      %1015 = vmatprep.subr.mxu0 0.0
      %1016 = vmatpush1.msra.mxu0 0.0
      %1017 = vmatprep.subr.mxu0 0.0
      %1018 = vmatpush1.msra.mxu0 0.0
      %1019 = vmatprep.subr.mxu0 0.0
      %1020 = vmatpush1.msra.mxu0 0.0
      %1021 = vmatprep.subr.mxu0 0.0
      %1022 = vmatpush1.msra.mxu0 0.0
      %1023 = vmatprep.subr.mxu0 0.0
      %1024 = vmatpush1.msra.mxu0 0.0
      %1025 = vmatprep.subr.mxu0 0.0
      %1026 = vmatpush1.msra.mxu0 0.0
      %1027 = vmatprep.subr.mxu0 0.0
      %1028 = vmatpush1.msra.mxu0 0.0
      %1029 = vmatprep.subr.mxu0 0.0
      %1030 = vmatpush1.msra.mxu0 0.0
      %1031 = vmatprep.subr.mxu0 0.0
      %1032 = vmatpush1.msra.mxu0 0.0
      %1033 = vmatprep.subr.mxu0 0.0
      %1034 = vmatpush1.msra.mxu0 0.0
      %1035 = vmatprep.subr.mxu0 0.0
      %1036 = vmatpush1.msra.mxu0 0.0
      %1037 = vmatprep.subr.mxu0 0.0
      %1038 = vmatpush1.msra.mxu0 0.0
      %1039 = vmatprep.subr.mxu0 0.0
      %1040 = vmatpush1.msra.mxu0 0.0
      %1041 = vmatprep.subr.mxu0 0.0
      %1042 = vmatpush1.msra.mxu0 0.0
      %1043 = vmatprep.subr.mxu0 0.0
      %1044 = vmatpush1.msra.mxu0 0.0
      %1045 = vmatprep.subr.mxu0 0.0
      %1046 = vmatpush1.msra.mxu0 0.0
      %1047 = vmatprep.subr.mxu0 0.0
      %1048 = vmatpush1.msra.mxu0 0.0
      %1049 = vmatprep.subr.mxu0 0.0
      %1050 = vmatpush1.msra.mxu0 0.0
      %1051 = vmatprep.subr.mxu0 0.0
      %1052 = vmatpush1.msra.mxu0 0.0
      %1053 = vmatprep.subr.mxu0 0.0
      %1054 = vmatpush1.msra.mxu0 0.0
      %1055 = vmatprep.mubr.f32.mxu0 0.0
      %1056 = vmatmul.mubr.f32.gmra.mrb[0].mxu0 %v980
      %v1057 = vpop.f32.mrb[0].mxu0
      %v1058 = vadd.f32 %v962, %v1057
      %v1059 = vpop.f32.mrb[0].mxu0
      %v1060 = vadd.f32 %v962, %v1059
      %1061 = vmatprep.mubr.f32.mxu0 0.0
      %1062 = vmatmul.mubr.f32.gmra.mrb[0].mxu0 %v983
      %v1063 = vpop.f32.mrb[0].mxu0
      %v1064 = vadd.f32 %v967, %v1063
      %v1065 = vpop.f32.mrb[0].mxu0
      %v1066 = vadd.f32 %v967, %v1065
      %1067 = vmatprep.mubr.f32.mxu0 0.0
      %1068 = vmatmul.mubr.f32.gmra.mrb[0].mxu0 %v986
      %v1069 = vpop.f32.mrb[0].mxu0
      %v1070 = vadd.f32 %v972, %v1069
      %v1071 = vpop.f32.mrb[0].mxu0
      %v1072 = vadd.f32 %v972, %v1071
      %1073 = vmatprep.mubr.f32.mxu0 0.0
      %1074 = vmatmul.mubr.f32.gmra.mrb[0].mxu0 %v989
      %v1075 = vpop.f32.mrb[0].mxu0
      %v1076 = vadd.f32 %v977, %v1075
      %v1077 = vpop.f32.mrb[0].mxu0
      %v1078 = vadd.f32 %v977, %v1077
      %1079 = vdwg.mxu0
      %v1080 = vmin.f32 %v1058, 0.0
      %v1081 = vmin.f32 %v1060, 0.0
      %v1082 = vmin.f32 %v1064, 0.0
      %v1083 = vmin.f32 %v1066, 0.0
      %v1084 = vmin.f32 %v1070, 0.0
      %v1085 = vmin.f32 %v1072, 0.0
      %v1086 = vmin.f32 %v1076, 0.0
      %v1087 = vmin.f32 %v1078, 0.0
      %v1088 = vmul.f32 %v1080, 1.442695
      %v1089 = vpow.pop %v1088
      %v1090 = vmul.f32 %v1081, 1.442695
      %v1091 = vpow.pop %v1090
      %v1092 = vmul.f32 %v1082, 1.442695
      %v1093 = vpow.pop %v1092
      %v1094 = vmul.f32 %v1083, 1.442695
      %v1095 = vpow.pop %v1094
      %v1096 = vmul.f32 %v1084, 1.442695
      %v1097 = vpow.pop %v1096
      %v1098 = vmul.f32 %v1085, 1.442695
      %v1099 = vpow.pop %v1098
      %v1100 = vmul.f32 %v1086, 1.442695
      %v1101 = vpow.pop %v1100
      %v1102 = vmul.f32 %v1087, 1.442695
      %v1103 = vpow.pop %v1102
      %vm1104 = vcmp.gt.f32.partialorder %v1058, 0.0
      %vm1105 = vcmp.gt.f32.partialorder %v1060, 0.0
      %vm1106 = vcmp.gt.f32.partialorder %v1064, 0.0
      %vm1107 = vcmp.gt.f32.partialorder %v1066, 0.0
      %vm1108 = vcmp.gt.f32.partialorder %v1070, 0.0
      %vm1109 = vcmp.gt.f32.partialorder %v1072, 0.0
      %vm1110 = vcmp.gt.f32.partialorder %v1076, 0.0
      %vm1111 = vcmp.gt.f32.partialorder %v1078, 0.0
      %v1112 = vsub.f32 %v1089, 1.0
      %v1113 = vsub.f32 %v1091, 1.0
      %v1114 = vsub.f32 %v1093, 1.0
      %v1115 = vsub.f32 %v1095, 1.0
      %v1116 = vsub.f32 %v1097, 1.0
      %v1117 = vsub.f32 %v1099, 1.0
      %v1118 = vsub.f32 %v1101, 1.0
      %v1119 = vsub.f32 %v1103, 1.0
      %v1120 = vsel %vm1104, %v1058, %v1112
      %v1121 = vsel %vm1105, %v1060, %v1113
      %v1122 = vsel %vm1106, %v1064, %v1114
      %v1123 = vsel %vm1107, %v1066, %v1115
      %v1124 = vsel %vm1108, %v1070, %v1116
      %v1125 = vsel %vm1109, %v1072, %v1117
      %v1126 = vsel %vm1110, %v1076, %v1118
      %v1127 = vsel %vm1111, %v1078, %v1119
      %1129 = vset.pattern.permute.xlu0 0
      %1130 = vperm.xlu0 %1129, %v955
      %v1131 = vpop.permute.xlu0 %1130
      %1134 = vset.pattern.permute.xlu0 0
      %1135 = vperm.xlu0 %1134, %v956
      %v1136 = vpop.permute.xlu0 %1135
      %1139 = vset.pattern.permute.xlu0 0
      %1140 = vperm.xlu0 %1139, %v957
      %v1141 = vpop.permute.xlu0 %1140
      %1144 = vset.pattern.permute.xlu0 0
      %1145 = vperm.xlu0 %1144, %v958
      %v1146 = vpop.permute.xlu0 %1145
      %v1149 = vsel %vm612, %v950, 0
      %v1152 = vsel %vm612, %v951, 0
      %v1155 = vsel %vm612, %v952, 0
      %v1158 = vsel %vm612, %v953, 0
      %1160 = vmatprep.subr.mxu0 %v1121
      %1161 = vmatpush1.msra.mxu0 %v1120
      %1162 = vmatprep.subr.mxu0 %v1123
      %1163 = vmatpush1.msra.mxu0 %v1122
      %1164 = vmatprep.subr.mxu0 %v1125
      %1165 = vmatpush1.msra.mxu0 %v1124
      %1166 = vmatprep.subr.mxu0 %v1127
      %1167 = vmatpush1.msra.mxu0 %v1126
      %1168 = vmatprep.subr.mxu0 0.0
      %1169 = vmatpush1.msra.mxu0 0.0
      %1170 = vmatprep.subr.mxu0 0.0
      %1171 = vmatpush1.msra.mxu0 0.0
      %1172 = vmatprep.subr.mxu0 0.0
      %1173 = vmatpush1.msra.mxu0 0.0
      %1174 = vmatprep.subr.mxu0 0.0
      %1175 = vmatpush1.msra.mxu0 0.0
      %1176 = vmatprep.subr.mxu0 0.0
      %1177 = vmatpush1.msra.mxu0 0.0
      %1178 = vmatprep.subr.mxu0 0.0
      %1179 = vmatpush1.msra.mxu0 0.0
      %1180 = vmatprep.subr.mxu0 0.0
      %1181 = vmatpush1.msra.mxu0 0.0
      %1182 = vmatprep.subr.mxu0 0.0
      %1183 = vmatpush1.msra.mxu0 0.0
      %1184 = vmatprep.subr.mxu0 0.0
      %1185 = vmatpush1.msra.mxu0 0.0
      %1186 = vmatprep.subr.mxu0 0.0
      %1187 = vmatpush1.msra.mxu0 0.0
      %1188 = vmatprep.subr.mxu0 0.0
      %1189 = vmatpush1.msra.mxu0 0.0
      %1190 = vmatprep.subr.mxu0 0.0
      %1191 = vmatpush1.msra.mxu0 0.0
      %1192 = vmatprep.subr.mxu0 0.0
      %1193 = vmatpush1.msra.mxu0 0.0
      %1194 = vmatprep.subr.mxu0 0.0
      %1195 = vmatpush1.msra.mxu0 0.0
      %1196 = vmatprep.subr.mxu0 0.0
      %1197 = vmatpush1.msra.mxu0 0.0
      %1198 = vmatprep.subr.mxu0 0.0
      %1199 = vmatpush1.msra.mxu0 0.0
      %1200 = vmatprep.subr.mxu0 0.0
      %1201 = vmatpush1.msra.mxu0 0.0
      %1202 = vmatprep.subr.mxu0 0.0
      %1203 = vmatpush1.msra.mxu0 0.0
      %1204 = vmatprep.subr.mxu0 0.0
      %1205 = vmatpush1.msra.mxu0 0.0
      %1206 = vmatprep.subr.mxu0 0.0
      %1207 = vmatpush1.msra.mxu0 0.0
      %1208 = vmatprep.subr.mxu0 0.0
      %1209 = vmatpush1.msra.mxu0 0.0
      %1210 = vmatprep.subr.mxu0 0.0
      %1211 = vmatpush1.msra.mxu0 0.0
      %1212 = vmatprep.subr.mxu0 0.0
      %1213 = vmatpush1.msra.mxu0 0.0
      %1214 = vmatprep.subr.mxu0 0.0
      %1215 = vmatpush1.msra.mxu0 0.0
      %1216 = vmatprep.subr.mxu0 0.0
      %1217 = vmatpush1.msra.mxu0 0.0
      %1218 = vmatprep.subr.mxu0 0.0
      %1219 = vmatpush1.msra.mxu0 0.0
      %1220 = vmatprep.subr.mxu0 0.0
      %1221 = vmatpush1.msra.mxu0 0.0
      %1222 = vmatprep.subr.mxu0 0.0
      %1223 = vmatpush1.msra.mxu0 0.0
      %1224 = vmatprep.mubr.f32.mxu0 0.0
      %1225 = vmatmul.mubr.f32.gmra.mrb[0].mxu0 %v1149
      %v1226 = vpop.f32.mrb[0].mxu0
      %v1227 = vadd.f32 %v1131, %v1226
      %v1228 = vpop.f32.mrb[0].mxu0
      %v1229 = vadd.f32 %v1131, %v1228
      %1230 = vmatprep.mubr.f32.mxu0 0.0
      %1231 = vmatmul.mubr.f32.gmra.mrb[0].mxu0 %v1152
      %v1232 = vpop.f32.mrb[0].mxu0
      %v1233 = vadd.f32 %v1136, %v1232
      %v1234 = vpop.f32.mrb[0].mxu0
      %v1235 = vadd.f32 %v1136, %v1234
      %1236 = vmatprep.mubr.f32.mxu0 0.0
      %1237 = vmatmul.mubr.f32.gmra.mrb[0].mxu0 %v1155
      %v1238 = vpop.f32.mrb[0].mxu0
      %v1239 = vadd.f32 %v1141, %v1238
      %v1240 = vpop.f32.mrb[0].mxu0
      %v1241 = vadd.f32 %v1141, %v1240
      %1242 = vmatprep.mubr.f32.mxu0 0.0
      %1243 = vmatmul.mubr.f32.gmra.mrb[0].mxu0 %v1158
      %v1244 = vpop.f32.mrb[0].mxu0
      %v1245 = vadd.f32 %v1146, %v1244
      %v1246 = vpop.f32.mrb[0].mxu0
      %v1247 = vadd.f32 %v1146, %v1246
      %1248 = vdwg.mxu0
      %v1249 = vmin.f32 %v1227, 0.0
      %v1250 = vmin.f32 %v1229, 0.0
      %v1251 = vmin.f32 %v1233, 0.0
      %v1252 = vmin.f32 %v1235, 0.0
      %v1253 = vmin.f32 %v1239, 0.0
      %v1254 = vmin.f32 %v1241, 0.0
      %v1255 = vmin.f32 %v1245, 0.0
      %v1256 = vmin.f32 %v1247, 0.0
      %v1257 = vmul.f32 %v1249, 1.442695
      %v1258 = vpow.pop %v1257
      %v1259 = vmul.f32 %v1250, 1.442695
      %v1260 = vpow.pop %v1259
      %v1261 = vmul.f32 %v1251, 1.442695
      %v1262 = vpow.pop %v1261
      %v1263 = vmul.f32 %v1252, 1.442695
      %v1264 = vpow.pop %v1263
      %v1265 = vmul.f32 %v1253, 1.442695
      %v1266 = vpow.pop %v1265
      %v1267 = vmul.f32 %v1254, 1.442695
      %v1268 = vpow.pop %v1267
      %v1269 = vmul.f32 %v1255, 1.442695
      %v1270 = vpow.pop %v1269
      %v1271 = vmul.f32 %v1256, 1.442695
      %v1272 = vpow.pop %v1271
      %vm1273 = vcmp.gt.f32.partialorder %v1227, 0.0
      %vm1274 = vcmp.gt.f32.partialorder %v1229, 0.0
      %vm1275 = vcmp.gt.f32.partialorder %v1233, 0.0
      %vm1276 = vcmp.gt.f32.partialorder %v1235, 0.0
      %vm1277 = vcmp.gt.f32.partialorder %v1239, 0.0
      %vm1278 = vcmp.gt.f32.partialorder %v1241, 0.0
      %vm1279 = vcmp.gt.f32.partialorder %v1245, 0.0
      %vm1280 = vcmp.gt.f32.partialorder %v1247, 0.0
      %v1281 = vsub.f32 %v1258, 1.0
      %v1282 = vsub.f32 %v1260, 1.0
      %v1283 = vsub.f32 %v1262, 1.0
      %v1284 = vsub.f32 %v1264, 1.0
      %v1285 = vsub.f32 %v1266, 1.0
      %v1286 = vsub.f32 %v1268, 1.0
      %v1287 = vsub.f32 %v1270, 1.0
      %v1288 = vsub.f32 %v1272, 1.0
      %v1289 = vsel %vm1273, %v1227, %v1281
      %v1290 = vsel %vm1274, %v1229, %v1282
      %v1291 = vsel %vm1275, %v1233, %v1283
      %v1292 = vsel %vm1276, %v1235, %v1284
      %v1293 = vsel %vm1277, %v1239, %v1285
      %v1294 = vsel %vm1278, %v1241, %v1286
      %v1295 = vsel %vm1279, %v1245, %v1287
      %v1296 = vsel %vm1280, %v1247, %v1288
      %v1297 = vadd.f32 %v931, %v1289
      %v1298 = vadd.f32 %v932, %v1290
      %v1299 = vadd.f32 %v933, %v1291
      %v1300 = vadd.f32 %v934, %v1292
      %v1301 = vadd.f32 %v935, %v1293
      %v1302 = vadd.f32 %v936, %v1294
      %v1303 = vadd.f32 %v937, %v1295
      %v1304 = vadd.f32 %v938, %v1296
      %v1305 = vld [vmem:[%s7] sm:$0x7]
      %v1307 = vsel %vm612, %v1305, 0
      %1309 = vmatprep.subr.mxu0 %v1298
      %1310 = vmatpush1.msra.mxu0 %v1297
      %1311 = vmatprep.subr.mxu0 %v1300
      %1312 = vmatpush1.msra.mxu0 %v1299
      %1313 = vmatprep.subr.mxu0 %v1302
      %1314 = vmatpush1.msra.mxu0 %v1301
      %1315 = vmatprep.subr.mxu0 %v1304
      %1316 = vmatpush1.msra.mxu0 %v1303
      %1317 = vmatprep.subr.mxu0 0.0
      %1318 = vmatpush1.msra.mxu0 0.0
      %1319 = vmatprep.subr.mxu0 0.0
      %1320 = vmatpush1.msra.mxu0 0.0
      %1321 = vmatprep.subr.mxu0 0.0
      %1322 = vmatpush1.msra.mxu0 0.0
      %1323 = vmatprep.subr.mxu0 0.0
      %1324 = vmatpush1.msra.mxu0 0.0
      %1325 = vmatprep.subr.mxu0 0.0
      %1326 = vmatpush1.msra.mxu0 0.0
      %1327 = vmatprep.subr.mxu0 0.0
      %1328 = vmatpush1.msra.mxu0 0.0
      %1329 = vmatprep.subr.mxu0 0.0
      %1330 = vmatpush1.msra.mxu0 0.0
      %1331 = vmatprep.subr.mxu0 0.0
      %1332 = vmatpush1.msra.mxu0 0.0
      %1333 = vmatprep.subr.mxu0 0.0
      %1334 = vmatpush1.msra.mxu0 0.0
      %1335 = vmatprep.subr.mxu0 0.0
      %1336 = vmatpush1.msra.mxu0 0.0
      %1337 = vmatprep.subr.mxu0 0.0
      %1338 = vmatpush1.msra.mxu0 0.0
      %1339 = vmatprep.subr.mxu0 0.0
      %1340 = vmatpush1.msra.mxu0 0.0
      %1341 = vmatprep.subr.mxu0 0.0
      %1342 = vmatpush1.msra.mxu0 0.0
      %1343 = vmatprep.subr.mxu0 0.0
      %1344 = vmatpush1.msra.mxu0 0.0
      %1345 = vmatprep.subr.mxu0 0.0
      %1346 = vmatpush1.msra.mxu0 0.0
      %1347 = vmatprep.subr.mxu0 0.0
      %1348 = vmatpush1.msra.mxu0 0.0
      %1349 = vmatprep.subr.mxu0 0.0
      %1350 = vmatpush1.msra.mxu0 0.0
      %1351 = vmatprep.subr.mxu0 0.0
      %1352 = vmatpush1.msra.mxu0 0.0
      %1353 = vmatprep.subr.mxu0 0.0
      %1354 = vmatpush1.msra.mxu0 0.0
      %1355 = vmatprep.subr.mxu0 0.0
      %1356 = vmatpush1.msra.mxu0 0.0
      %1357 = vmatprep.subr.mxu0 0.0
      %1358 = vmatpush1.msra.mxu0 0.0
      %1359 = vmatprep.subr.mxu0 0.0
      %1360 = vmatpush1.msra.mxu0 0.0
      %1361 = vmatprep.subr.mxu0 0.0
      %1362 = vmatpush1.msra.mxu0 0.0
      %1363 = vmatprep.subr.mxu0 0.0
      %1364 = vmatpush1.msra.mxu0 0.0
      %1365 = vmatprep.subr.mxu0 0.0
      %1366 = vmatpush1.msra.mxu0 0.0
      %1367 = vmatprep.subr.mxu0 0.0
      %1368 = vmatpush1.msra.mxu0 0.0
      %1369 = vmatprep.subr.mxu0 0.0
      %1370 = vmatpush1.msra.mxu0 0.0
      %1371 = vmatprep.subr.mxu0 0.0
      %1372 = vmatpush1.msra.mxu0 0.0
      %1373 = vmatprep.mubr.f32.mxu0 0.0
      %1374 = vmatmul.mubr.f32.gmra.mrb[0].mxu0 %v1307
      %v1375 = vpop.f32.mrb[0].mxu0
      %v1376 = vadd.f32 0.0, %v1375
      %v1377 = vpop.f32.mrb[0].mxu0
      %v1378 = vadd.f32 0.0, %v1377
      %1379 = vdwg.mxu0
      %v1380 = vmin.f32 %v1376, 0.0
      %v1381 = vmin.f32 %v1378, 0.0
      %v1382 = vmul.f32 %v1380, 1.442695
      %v1383 = vpow.pop %v1382
      %v1384 = vmul.f32 %v1381, 1.442695
      %v1385 = vpow.pop %v1384
      %vm1386 = vcmp.gt.f32.partialorder %v1376, 0.0
      %vm1387 = vcmp.gt.f32.partialorder %v1378, 0.0
      %v1388 = vsub.f32 %v1383, 1.0
      %v1389 = vsub.f32 %v1385, 1.0
      %v1390 = vsel %vm1386, %v1376, %v1388
      %v1391 = vsel %vm1387, %v1378, %v1389
      %v1392 = vld [vmem:[%s8] sm:$0x7]
      %1394 = vset.pattern.permute.xlu0 0
      %1395 = vperm.xlu0 %1394, %v1392
      %v1396 = vpop.permute.xlu0 %1395
      %v1398 = vlaneseq
      %v1399 = vshrl.u32 %v1398, 7
      %v1400 = vsub.s32 0, %v1399
      %v1401 = vrot.slane %v1390, %v1400
      %v1402 = vlaneseq
      %v1403 = vshrl.u32 %v1402, 7
      %v1404 = vsub.s32 0, %v1403
      %v1405 = vrot.slane %v1391, %v1404
      %v1406 = vmul.f32 %v1396, %v1401
      %v1407 = vmul.f32 %v1396, %v1405
      %1408 = vset.pattern.permute.xlu0 1
      %1409 = vperm.xlu0 %1408, %v1392
      %v1410 = vpop.permute.xlu0 %1409
      %v1412 = vlaneseq
      %v1413 = vshrl.u32 %v1412, 7
      %v1414 = vsub.s32 1, %v1413
      %v1415 = vrot.slane %v1390, %v1414
      %v1416 = vlaneseq
      %v1417 = vshrl.u32 %v1416, 7
      %v1418 = vsub.s32 1, %v1417
      %v1419 = vrot.slane %v1391, %v1418
      %v1420 = vmul.f32 %v1410, %v1415
      %v1421 = vmul.f32 %v1410, %v1419
      %v1422 = vadd.f32 %v1406, %v1420
      %v1423 = vadd.f32 %v1407, %v1421
      %1424 = vset.pattern.permute.xlu0 2
      %1425 = vperm.xlu0 %1424, %v1392
      %v1426 = vpop.permute.xlu0 %1425
      %v1428 = vlaneseq
      %v1429 = vshrl.u32 %v1428, 7
      %v1430 = vsub.s32 2, %v1429
      %v1431 = vrot.slane %v1390, %v1430
      %v1432 = vlaneseq
      %v1433 = vshrl.u32 %v1432, 7
      %v1434 = vsub.s32 2, %v1433
      %v1435 = vrot.slane %v1391, %v1434
      %v1436 = vmul.f32 %v1426, %v1431
      %v1437 = vmul.f32 %v1426, %v1435
      %v1438 = vadd.f32 %v1422, %v1436
      %v1439 = vadd.f32 %v1423, %v1437
      %v1442 = vcombine.low %v1438, %v1439
      %v1444 = vadd.f32 %v392, %v1442
      %1445 = vst [vmem:[%s390] sm:$0x77] %v1444
      %s1446 = smul.u32 2, %s25
      %p1447 = scmp.lt.s32.totalorder %s24, 1
      %s1448 = scalar_select %p1447, %s24, 1
      %p1449 = scmp.lt.s32.totalorder %s1446, 1
      %s1450 = scalar_select %p1449, %s1446, 1
      %s1451 = smul.addr %s1448, 2
      %s1452 = sadd.s32 %s1450, %s1451
      %s1453 = smul.addr %s1452, 4
      %s1454 = scalar_lea.vmem %s9, %s1453
      // Predicated region
      $region57: #{tpu_custom_call.1} parent=55 // pred_check
        %p1455 = pneg %p253
      $region58: #{tpu_custom_call.1} parent=55 // pred_check_branch
        %1457 = sbr.rel (%p1455) target = $region60
      $region59: #{tpu_custom_call.1} parent=55 // pred_region
        %s1458 = smul.u32 2, %s25
      $region60: #{tpu_custom_call.1} parent=55 // pred_fallthru
        _
    $region56: #{tpu_custom_call.1} parent=5 // pred_fallthru
      _
    %p1459 = scmp.le.s32.totalorder 2, %s15
    // Predicated region
    $region61: #{tpu_custom_call.1} parent=5 // pred_check
      %p1460 = pneg %p1459
    $region62: #{tpu_custom_call.1} parent=5 // pred_check_branch
      %1462 = sbr.rel (%p1460) target = $region64
    $region63: #{tpu_custom_call.1} parent=5 // pred_region
      %s1463 = ssub.s32 %s15, 2
      // Predicated region
      $region65: #{tpu_custom_call.1} parent=63 // pred_check
        %p1464 = pneg %p259
      $region66: #{tpu_custom_call.1} parent=63 // pred_check_branch
        %1466 = sbr.rel (%p1464) target = $region68
      $region67: #{tpu_custom_call.1} parent=63 // pred_region
        %s1467 = smul.u32 2, %s27
        %p1468 = scmp.lt.s32.totalorder %s26, 1
        %s1469 = scalar_select %p1468, %s26, 1
        %p1470 = scmp.lt.s32.totalorder %s1467, 1
        %s1471 = scalar_select %p1470, %s1467, 1
        %s1472 = smul.addr %s1469, 2
        %s1473 = sadd.s32 %s1471, %s1472
        %s1474 = smul.addr %s1473, 4
        %s1475 = scalar_lea.vmem %s9, %s1474
      $region68: #{tpu_custom_call.1} parent=63 // pred_fallthru
        _
    $region64: #{tpu_custom_call.1} parent=5 // pred_fallthru
      _
  $region6: #{tpu_custom_call.1} parent=0 // loop_footer
    %s19 = sadd.s32 1, %s15
  $region7: #{tpu_custom_call.1} parent=0 // loop_footer_branch
    %14 = sbr.rel target = $region3
  $region8: #{tpu_custom_call.1} parent=0 // loop_exit
    _

</llo_original>
